<compile_context>
chip_gen: v7x
topology: tpu7x:2x2x1
jax: 0.10.0
libtpu: 0.0.40
codegen_flags: <defaults>
</compile_context>

<pallas_src>
import math

import jax
import jax.numpy as jnp
from jax.experimental import pallas as pl
from jax.experimental.pallas import tpu as pltpu

# The PyTorch file leaves D_MODEL / H / P_DROPOUT as module-level constants;
# pick small concrete values consistent with the module.
D_MODEL = 32
H = 4
D_K = D_Q = D_V = D_MODEL // H
P_DROPOUT = 0.1          # TODO(synk): dropout implemented as identity (eval mode); train-mode RNG dropout omitted.
LN_EPS = 1e-5            # nn.LayerNorm default eps


def _layer_norm(y, gamma, beta):
    mu = jnp.mean(y, axis=-1, keepdims=True)
    var = jnp.mean((y - mu) ** 2, axis=-1, keepdims=True)          # biased var, like torch
    return (y - mu) * jax.lax.rsqrt(var + LN_EPS) * gamma + beta


# ----------------------------------------------------------------------------
# Fused kernel: QKV proj -> per-head attention -> buggy view -> out proj ->
# residual+LN -> FFN -> residual+LN.   Grid = (B // BT,), block = (BT, S, D).
# ----------------------------------------------------------------------------
def _encoder_block_kernel(x_ref, wq_ref, bq_ref, wk_ref, bk_ref, wv_ref, bv_ref,
                          wo_ref, bo_ref, g_ref, be_ref,
                          w1_ref, b1_ref, w2_ref, b2_ref, out_ref):
    bt, s, d = x_ref.shape
    x3 = x_ref[...]                                # (BT, S, D)
    x = x3.reshape(bt * s, d)                      # collapse batch into sublanes

    # Dense QKV projections over all BT*S rows in one MXU matmul each.
    # (1/sqrt(D_K) is already folded into wq/bq by the wrapper.)
    q = jnp.dot(x, wq_ref[...], preferred_element_type=jnp.float32) + bq_ref[...]
    k = jnp.dot(x, wk_ref[...], preferred_element_type=jnp.float32) + bk_ref[...]
    v = jnp.dot(x, wv_ref[...], preferred_element_type=jnp.float32) + bv_ref[...]

    q3 = q.reshape(bt, s, H * D_Q)
    k3 = k.reshape(bt, s, H * D_K)
    v3 = v.reshape(bt, s, H * D_V)

    # Per-head scaled-dot-product attention, batched over the batch tile.
    # pieces[r][j] holds the (BT, 1, D_V) chunk landing at row r, lane block j of the
    # "buggy view" matrix: torch .view(B, S, H*D_V) of the contiguous (B, H, S, D_V)
    # tensor, i.e. stack-row (h*S + t) -> (row = (h*S+t)//H, block = (h*S+t)%H).
    pieces = [[None] * H for _ in range(s)]
    for h in range(H):                             # static unroll over heads
        qh = q3[:, :, h * D_Q:(h + 1) * D_Q]       # (BT, S, D_Q)
        kh = k3[:, :, h * D_K:(h + 1) * D_K]       # (BT, S, D_K)
        vh = v3[:, :, h * D_V:(h + 1) * D_V]       # (BT, S, D_V)
        att = jnp.einsum('bqd,bkd->bqk', qh, kh,
                         preferred_element_type=jnp.float32)         # (BT, S, S)
        m = jnp.max(att, axis=-1, keepdims=True)                     # softmax (dim=-1)
        e = jnp.exp(att - m)
        denom = jnp.sum(e, axis=-1, keepdims=True)
        p = e * pl.reciprocal(denom, approx=True)                    # EUP reciprocal
        nvh = jnp.einsum('bqk,bkd->bqd', p, vh,
                         preferred_element_type=jnp.float32)         # (BT, S, D_V)
        for t in range(s):
            flat_row = h * s + t
            pieces[flat_row // H][flat_row % H] = nvh[:, t:t + 1, :]  # (BT, 1, D_V)

    # Assemble the buggy-view matrix entirely in VMEM (no HBM roundtrip),
    # lane-dense last dim of H*D_V.
    rows = [jnp.concatenate(pieces[r], axis=-1) for r in range(s)]    # (BT, 1, H*D_V)
    nv = jnp.concatenate(rows, axis=1).reshape(bt * s, H * D_V)       # (BT*S, H*D_V)

    gamma = g_ref[...]
    beta = be_ref[...]

    mha = jnp.dot(nv, wo_ref[...], preferred_element_type=jnp.float32) + bo_ref[...]
    y = _layer_norm(x + mha, gamma, beta)          # + dropout1(.) == identity (eval)

    z = jnp.dot(y, w1_ref[...], preferred_element_type=jnp.float32) + b1_ref[...]
    z = jnp.maximum(z, 0.0)                        # ReLU
    z = jnp.dot(z, w2_ref[...], preferred_element_type=jnp.float32) + b2_ref[...]
    z = _layer_norm(y + z, gamma, beta)            # + dropout2(.) == identity (eval)

    out_ref[...] = z.reshape(bt, s, d)


# ----------------------------------------------------------------------------
# Wrapper
# ----------------------------------------------------------------------------
def _pick_batch_tile(batch, seq, max_rows=256):
    """Largest divisor of `batch` s.t. the per-step dense matmuls see <= max_rows rows."""
    bt = 1
    for cand in range(1, batch + 1):
        if batch % cand == 0 and cand * seq <= max_rows:
            bt = cand
    return bt


def encoder_block(x, params, batch_tile=None):
    (wq, bq, wk, bk, wv, bv, wo, bo, g, be, w1, b1, w2, b2) = params
    B, S, D = x.shape
    assert D == D_MODEL

    BT = _pick_batch_tile(B, S) if batch_tile is None else batch_tile
    assert B % BT == 0

    # Fold the 1/sqrt(D_K) attention scale into the Q projection (param prep, done
    # once outside the kernel -> removes the per-element scale from the kernel VPU).
    scale = 1.0 / math.sqrt(D_K)
    wq_s = wq * scale
    bq_s = bq * scale

    def full(a):   # untiled: whole (small) weight resident every grid step
        return pl.BlockSpec(a.shape, lambda i, nd=a.ndim: (0,) * nd)

    out = pl.pallas_call(
        _encoder_block_kernel,
        out_shape=jax.ShapeDtypeStruct((B, S, D), jnp.float32),
        grid=(B // BT,),
        in_specs=[pl.BlockSpec((BT, S, D), lambda i: (i, 0, 0)),
                  full(wq_s), full(bq_s), full(wk), full(bk), full(wv), full(bv),
                  full(wo), full(bo), full(g), full(be),
                  full(w1), full(b1), full(w2), full(b2)],
        out_specs=pl.BlockSpec((BT, S, D), lambda i: (i, 0, 0)),
        compiler_params=pltpu.CompilerParams(dimension_semantics=("parallel",)),
    )(x, wq_s, bq_s, wk, bk, wv, bv, wo, bo, g, be, w1, b1, w2, b2)
    return out


# ----------------------------------------------------------------------------
# Deterministic parameter init (synthetic; mimics nn.Linear's U(-1/sqrt(in), 1/sqrt(in)))
# ----------------------------------------------------------------------------
def init_params(key):
    def linear(k, fan_in, fan_out):
        k1, k2 = jax.random.split(k)
        bound = 1.0 / math.sqrt(fan_in)
        w = jax.random.uniform(k1, (fan_in, fan_out), jnp.float32, -bound, bound)
        b = jax.random.uniform(k2, (1, fan_out), jnp.float32, -bound, bound)
        return w, b

    ks = jax.random.split(key, 6)
    wq, bq = linear(ks[0], D_MODEL, H * D_Q)
    wk, bk = linear(ks[1], D_MODEL, H * D_K)
    wv, bv = linear(ks[2], D_MODEL, H * D_V)
    wo, bo = linear(ks[3], H * D_V, D_MODEL)
    w1, b1 = linear(ks[4], D_MODEL, 4 * D_MODEL)
    w2, b2 = linear(ks[5], 4 * D_MODEL, D_MODEL)
    g = jnp.ones((1, D_MODEL), jnp.float32)      # shared LayerNorm weight
    be = jnp.zeros((1, D_MODEL), jnp.float32)    # shared LayerNorm bias
    return (wq, bq, wk, bk, wv, bv, wo, bo, g, be, w1, b1, w2, b2)


# ----------------------------------------------------------------------------
# Pure-JAX reference (mirrors the PyTorch forward exactly, incl. the buggy view)
# ----------------------------------------------------------------------------
def encoder_block_ref(x, params):
    (wq, bq, wk, bk, wv, bv, wo, bo, g, be, w1, b1, w2, b2) = params
    B, S, D = x.shape
    q = (x @ wq + bq).reshape(B, S, H, D_Q).transpose(0, 2, 1, 3)
    k = (x @ wk + bk).reshape(B, S, H, D_K).transpose(0, 2, 1, 3)
    v = (x @ wv + bv).reshape(B, S, H, D_V).transpose(0, 2, 1, 3)
    att = (q @ jnp.swapaxes(k, -2, -1)) / math.sqrt(D_K)
    att = jax.nn.softmax(att, axis=-1)
    nv = att @ v                                  # (B, H, S, D_V), "contiguous"
    nv = nv.reshape(B, S, H * D_V)                # == torch .view(B, S, H*D_V)
    mha = nv @ wo + bo

    def ln(t):
        mu = t.mean(-1, keepdims=True)
        var = ((t - mu) ** 2).mean(-1, keepdims=True)
        return (t - mu) / jnp.sqrt(var + LN_EPS) * g + be

    y = ln(x + mha)
    z = jnp.maximum(y @ w1 + b1, 0.0) @ w2 + b2
    return ln(y + z)


if __name__ == "__main__":
    key = jax.random.PRNGKey(0)
    kx, kp = jax.random.split(key)
    B, S = 2, 8
    x = jax.random.normal(kx, (B, S, D_MODEL), jnp.float32)
    params = init_params(kp)

    out = encoder_block(x, params)
    out = jax.block_until_ready(out)

    ref = encoder_block_ref(x, params)
    assert out.shape == (B, S, D_MODEL)
    # Tolerance slightly relaxed vs f32 reference because the softmax normalization
    # uses the approximate EUP reciprocal (pl.reciprocal(..., approx=True)).
    assert jnp.allclose(out, ref, atol=5e-3, rtol=5e-3), "Pallas output != JAX reference"
    print("KERNEL_OK")
</pallas_src>

<mosaic_0001>
module attributes {stable_mosaic.version = 11 : i64} {
  func.func @_encoder_block_kernel(%arg0: i32, %arg1: memref<2x8x32xf32, #tpu.memory_space<vmem>>, %arg2: memref<32x32xf32, #tpu.memory_space<vmem>>, %arg3: memref<1x32xf32, #tpu.memory_space<vmem>>, %arg4: memref<32x32xf32, #tpu.memory_space<vmem>>, %arg5: memref<1x32xf32, #tpu.memory_space<vmem>>, %arg6: memref<32x32xf32, #tpu.memory_space<vmem>>, %arg7: memref<1x32xf32, #tpu.memory_space<vmem>>, %arg8: memref<32x32xf32, #tpu.memory_space<vmem>>, %arg9: memref<1x32xf32, #tpu.memory_space<vmem>>, %arg10: memref<1x32xf32, #tpu.memory_space<vmem>>, %arg11: memref<1x32xf32, #tpu.memory_space<vmem>>, %arg12: memref<32x128xf32, #tpu.memory_space<vmem>>, %arg13: memref<1x128xf32, #tpu.memory_space<vmem>>, %arg14: memref<128x32xf32, #tpu.memory_space<vmem>>, %arg15: memref<1x32xf32, #tpu.memory_space<vmem>>, %arg16: memref<2x8x32xf32, #tpu.memory_space<vmem>>) attributes {dimension_semantics = [#tpu.dimension_semantics<parallel>], iteration_bounds = array<i64: 1>, scalar_prefetch = 0 : i64, scratch_operands = 0 : i64, tpu.core_type = #tpu.core_type<tc>, window_params = [{transform_indices = @transform_0, window_bounds = array<i64: 2, 8, 32>}, {pipeline_mode = #tpu.pipeline_mode<synchronous>, transform_indices = @transform_1, window_bounds = array<i64: 32, 32>}, {pipeline_mode = #tpu.pipeline_mode<synchronous>, transform_indices = @transform_2, window_bounds = array<i64: 1, 32>}, {pipeline_mode = #tpu.pipeline_mode<synchronous>, transform_indices = @transform_3, window_bounds = array<i64: 32, 32>}, {pipeline_mode = #tpu.pipeline_mode<synchronous>, transform_indices = @transform_4, window_bounds = array<i64: 1, 32>}, {pipeline_mode = #tpu.pipeline_mode<synchronous>, transform_indices = @transform_5, window_bounds = array<i64: 32, 32>}, {pipeline_mode = #tpu.pipeline_mode<synchronous>, transform_indices = @transform_6, window_bounds = array<i64: 1, 32>}, {pipeline_mode = #tpu.pipeline_mode<synchronous>, transform_indices = @transform_7, window_bounds = array<i64: 32, 32>}, {pipeline_mode = #tpu.pipeline_mode<synchronous>, transform_indices = @transform_8, window_bounds = array<i64: 1, 32>}, {pipeline_mode = #tpu.pipeline_mode<synchronous>, transform_indices = @transform_9, window_bounds = array<i64: 1, 32>}, {pipeline_mode = #tpu.pipeline_mode<synchronous>, transform_indices = @transform_10, window_bounds = array<i64: 1, 32>}, {pipeline_mode = #tpu.pipeline_mode<synchronous>, transform_indices = @transform_11, window_bounds = array<i64: 32, 128>}, {pipeline_mode = #tpu.pipeline_mode<synchronous>, transform_indices = @transform_12, window_bounds = array<i64: 1, 128>}, {pipeline_mode = #tpu.pipeline_mode<synchronous>, transform_indices = @transform_13, window_bounds = array<i64: 128, 32>}, {pipeline_mode = #tpu.pipeline_mode<synchronous>, transform_indices = @transform_14, window_bounds = array<i64: 1, 32>}, {transform_indices = @transform_15, window_bounds = array<i64: 2, 8, 32>}]} {
    %c0 = arith.constant 0 : index
    %c0_0 = arith.constant 0 : index
    %c0_1 = arith.constant 0 : index
    %0 = vector.load %arg1[%c0, %c0_0, %c0_1] : memref<2x8x32xf32, #tpu.memory_space<vmem>>, vector<2x8x32xf32>
    %1 = vector.shape_cast %0 : vector<2x8x32xf32> to vector<16x32xf32>
    %c0_2 = arith.constant 0 : index
    %c0_3 = arith.constant 0 : index
    %2 = vector.load %arg2[%c0_2, %c0_3] : memref<32x32xf32, #tpu.memory_space<vmem>>, vector<32x32xf32>
    %cst = arith.constant dense<0.000000e+00> : vector<16x32xf32>
    %3 = tpu.matmul %1, %2, %cst {dimension_numbers = #tpu.dot_dimension_numbers<[1], [0], [0], [1], [0, 0, 1, 1], [], []>} : vector<16x32xf32>, vector<32x32xf32>, vector<16x32xf32> -> vector<16x32xf32>
    %c0_4 = arith.constant 0 : index
    %c0_5 = arith.constant 0 : index
    %4 = vector.load %arg3[%c0_4, %c0_5] : memref<1x32xf32, #tpu.memory_space<vmem>>, vector<1x32xf32>
    %5 = vector.broadcast %4 : vector<1x32xf32> to vector<16x32xf32>
    %6 = arith.addf %3, %5 : vector<16x32xf32>
    %c0_6 = arith.constant 0 : index
    %c0_7 = arith.constant 0 : index
    %7 = vector.load %arg4[%c0_6, %c0_7] : memref<32x32xf32, #tpu.memory_space<vmem>>, vector<32x32xf32>
    %cst_8 = arith.constant dense<0.000000e+00> : vector<16x32xf32>
    %8 = tpu.matmul %1, %7, %cst_8 {dimension_numbers = #tpu.dot_dimension_numbers<[1], [0], [0], [1], [0, 0, 1, 1], [], []>} : vector<16x32xf32>, vector<32x32xf32>, vector<16x32xf32> -> vector<16x32xf32>
    %c0_9 = arith.constant 0 : index
    %c0_10 = arith.constant 0 : index
    %9 = vector.load %arg5[%c0_9, %c0_10] : memref<1x32xf32, #tpu.memory_space<vmem>>, vector<1x32xf32>
    %10 = vector.broadcast %9 : vector<1x32xf32> to vector<16x32xf32>
    %11 = arith.addf %8, %10 : vector<16x32xf32>
    %c0_11 = arith.constant 0 : index
    %c0_12 = arith.constant 0 : index
    %12 = vector.load %arg6[%c0_11, %c0_12] : memref<32x32xf32, #tpu.memory_space<vmem>>, vector<32x32xf32>
    %cst_13 = arith.constant dense<0.000000e+00> : vector<16x32xf32>
    %13 = tpu.matmul %1, %12, %cst_13 {dimension_numbers = #tpu.dot_dimension_numbers<[1], [0], [0], [1], [0, 0, 1, 1], [], []>} : vector<16x32xf32>, vector<32x32xf32>, vector<16x32xf32> -> vector<16x32xf32>
    %c0_14 = arith.constant 0 : index
    %c0_15 = arith.constant 0 : index
    %14 = vector.load %arg7[%c0_14, %c0_15] : memref<1x32xf32, #tpu.memory_space<vmem>>, vector<1x32xf32>
    %15 = vector.broadcast %14 : vector<1x32xf32> to vector<16x32xf32>
    %16 = arith.addf %13, %15 : vector<16x32xf32>
    %17 = vector.shape_cast %6 : vector<16x32xf32> to vector<2x8x32xf32>
    %18 = vector.shape_cast %11 : vector<16x32xf32> to vector<2x8x32xf32>
    %19 = vector.shape_cast %16 : vector<16x32xf32> to vector<2x8x32xf32>
    %20 = vector.extract_strided_slice %17 {offsets = [0, 0, 0], sizes = [2, 8, 8], strides = [1, 1, 1]} : vector<2x8x32xf32> to vector<2x8x8xf32>
    %21 = vector.extract_strided_slice %18 {offsets = [0, 0, 0], sizes = [2, 8, 8], strides = [1, 1, 1]} : vector<2x8x32xf32> to vector<2x8x8xf32>
    %22 = vector.extract_strided_slice %19 {offsets = [0, 0, 0], sizes = [2, 8, 8], strides = [1, 1, 1]} : vector<2x8x32xf32> to vector<2x8x8xf32>
    "tpu.trace_start"() <{level = 10 : i32, message = "bqd,bkd->bqk"}> : () -> ()
    %cst_16 = arith.constant dense<0.000000e+00> : vector<2x8x8xf32>
    %23 = tpu.matmul %20, %21, %cst_16 {dimension_numbers = #tpu.dot_dimension_numbers<[2], [2], [1], [1], [0, 0, 0, 1, 1, 1], [0], [0]>} : vector<2x8x8xf32>, vector<2x8x8xf32>, vector<2x8x8xf32> -> vector<2x8x8xf32>
    "tpu.trace_stop"() : () -> ()
    %cst_17 = arith.constant dense<0xFF800000> : vector<2x8xf32>
    %24 = vector.multi_reduction <maximumf>, %23, %cst_17 [2] : vector<2x8x8xf32> to vector<2x8xf32>
    %25 = vector.shape_cast %24 : vector<2x8xf32> to vector<2x8x1xf32>
    %26 = vector.broadcast %25 : vector<2x8x1xf32> to vector<2x8x8xf32>
    %27 = arith.subf %23, %26 : vector<2x8x8xf32>
    %28 = math.exp %27 : vector<2x8x8xf32>
    %cst_18 = arith.constant dense<0.000000e+00> : vector<2x8xf32>
    %29 = vector.multi_reduction <add>, %28, %cst_18 [2] : vector<2x8x8xf32> to vector<2x8xf32>
    %30 = vector.shape_cast %29 : vector<2x8xf32> to vector<2x8x1xf32>
    %31 = tpu.reciprocal %30 {approx = true} : vector<2x8x1xf32> -> vector<2x8x1xf32>
    %32 = vector.broadcast %31 : vector<2x8x1xf32> to vector<2x8x8xf32>
    %33 = arith.mulf %28, %32 : vector<2x8x8xf32>
    "tpu.trace_start"() <{level = 10 : i32, message = "bqk,bkd->bqd"}> : () -> ()
    %cst_19 = arith.constant dense<0.000000e+00> : vector<2x8x8xf32>
    %34 = tpu.matmul %33, %22, %cst_19 {dimension_numbers = #tpu.dot_dimension_numbers<[2], [1], [1], [2], [0, 0, 0, 1, 1, 2], [0], [0]>} : vector<2x8x8xf32>, vector<2x8x8xf32>, vector<2x8x8xf32> -> vector<2x8x8xf32>
    "tpu.trace_stop"() : () -> ()
    %35 = vector.extract_strided_slice %34 {offsets = [0, 0, 0], sizes = [2, 1, 8], strides = [1, 1, 1]} : vector<2x8x8xf32> to vector<2x1x8xf32>
    %36 = vector.extract_strided_slice %34 {offsets = [0, 1, 0], sizes = [2, 1, 8], strides = [1, 1, 1]} : vector<2x8x8xf32> to vector<2x1x8xf32>
    %37 = vector.extract_strided_slice %34 {offsets = [0, 2, 0], sizes = [2, 1, 8], strides = [1, 1, 1]} : vector<2x8x8xf32> to vector<2x1x8xf32>
    %38 = vector.extract_strided_slice %34 {offsets = [0, 3, 0], sizes = [2, 1, 8], strides = [1, 1, 1]} : vector<2x8x8xf32> to vector<2x1x8xf32>
    %39 = vector.extract_strided_slice %34 {offsets = [0, 4, 0], sizes = [2, 1, 8], strides = [1, 1, 1]} : vector<2x8x8xf32> to vector<2x1x8xf32>
    %40 = vector.extract_strided_slice %34 {offsets = [0, 5, 0], sizes = [2, 1, 8], strides = [1, 1, 1]} : vector<2x8x8xf32> to vector<2x1x8xf32>
    %41 = vector.extract_strided_slice %34 {offsets = [0, 6, 0], sizes = [2, 1, 8], strides = [1, 1, 1]} : vector<2x8x8xf32> to vector<2x1x8xf32>
    %42 = vector.extract_strided_slice %34 {offsets = [0, 7, 0], sizes = [2, 1, 8], strides = [1, 1, 1]} : vector<2x8x8xf32> to vector<2x1x8xf32>
    %43 = vector.extract_strided_slice %17 {offsets = [0, 0, 8], sizes = [2, 8, 8], strides = [1, 1, 1]} : vector<2x8x32xf32> to vector<2x8x8xf32>
    %44 = vector.extract_strided_slice %18 {offsets = [0, 0, 8], sizes = [2, 8, 8], strides = [1, 1, 1]} : vector<2x8x32xf32> to vector<2x8x8xf32>
    %45 = vector.extract_strided_slice %19 {offsets = [0, 0, 8], sizes = [2, 8, 8], strides = [1, 1, 1]} : vector<2x8x32xf32> to vector<2x8x8xf32>
    "tpu.trace_start"() <{level = 10 : i32, message = "bqd,bkd->bqk"}> : () -> ()
    %cst_20 = arith.constant dense<0.000000e+00> : vector<2x8x8xf32>
    %46 = tpu.matmul %43, %44, %cst_20 {dimension_numbers = #tpu.dot_dimension_numbers<[2], [2], [1], [1], [0, 0, 0, 1, 1, 1], [0], [0]>} : vector<2x8x8xf32>, vector<2x8x8xf32>, vector<2x8x8xf32> -> vector<2x8x8xf32>
    "tpu.trace_stop"() : () -> ()
    %cst_21 = arith.constant dense<0xFF800000> : vector<2x8xf32>
    %47 = vector.multi_reduction <maximumf>, %46, %cst_21 [2] : vector<2x8x8xf32> to vector<2x8xf32>
    %48 = vector.shape_cast %47 : vector<2x8xf32> to vector<2x8x1xf32>
    %49 = vector.broadcast %48 : vector<2x8x1xf32> to vector<2x8x8xf32>
    %50 = arith.subf %46, %49 : vector<2x8x8xf32>
    %51 = math.exp %50 : vector<2x8x8xf32>
    %cst_22 = arith.constant dense<0.000000e+00> : vector<2x8xf32>
    %52 = vector.multi_reduction <add>, %51, %cst_22 [2] : vector<2x8x8xf32> to vector<2x8xf32>
    %53 = vector.shape_cast %52 : vector<2x8xf32> to vector<2x8x1xf32>
    %54 = tpu.reciprocal %53 {approx = true} : vector<2x8x1xf32> -> vector<2x8x1xf32>
    %55 = vector.broadcast %54 : vector<2x8x1xf32> to vector<2x8x8xf32>
    %56 = arith.mulf %51, %55 : vector<2x8x8xf32>
    "tpu.trace_start"() <{level = 10 : i32, message = "bqk,bkd->bqd"}> : () -> ()
    %cst_23 = arith.constant dense<0.000000e+00> : vector<2x8x8xf32>
    %57 = tpu.matmul %56, %45, %cst_23 {dimension_numbers = #tpu.dot_dimension_numbers<[2], [1], [1], [2], [0, 0, 0, 1, 1, 2], [0], [0]>} : vector<2x8x8xf32>, vector<2x8x8xf32>, vector<2x8x8xf32> -> vector<2x8x8xf32>
    "tpu.trace_stop"() : () -> ()
    %58 = vector.extract_strided_slice %57 {offsets = [0, 0, 0], sizes = [2, 1, 8], strides = [1, 1, 1]} : vector<2x8x8xf32> to vector<2x1x8xf32>
    %59 = vector.extract_strided_slice %57 {offsets = [0, 1, 0], sizes = [2, 1, 8], strides = [1, 1, 1]} : vector<2x8x8xf32> to vector<2x1x8xf32>
    %60 = vector.extract_strided_slice %57 {offsets = [0, 2, 0], sizes = [2, 1, 8], strides = [1, 1, 1]} : vector<2x8x8xf32> to vector<2x1x8xf32>
    %61 = vector.extract_strided_slice %57 {offsets = [0, 3, 0], sizes = [2, 1, 8], strides = [1, 1, 1]} : vector<2x8x8xf32> to vector<2x1x8xf32>
    %62 = vector.extract_strided_slice %57 {offsets = [0, 4, 0], sizes = [2, 1, 8], strides = [1, 1, 1]} : vector<2x8x8xf32> to vector<2x1x8xf32>
    %63 = vector.extract_strided_slice %57 {offsets = [0, 5, 0], sizes = [2, 1, 8], strides = [1, 1, 1]} : vector<2x8x8xf32> to vector<2x1x8xf32>
    %64 = vector.extract_strided_slice %57 {offsets = [0, 6, 0], sizes = [2, 1, 8], strides = [1, 1, 1]} : vector<2x8x8xf32> to vector<2x1x8xf32>
    %65 = vector.extract_strided_slice %57 {offsets = [0, 7, 0], sizes = [2, 1, 8], strides = [1, 1, 1]} : vector<2x8x8xf32> to vector<2x1x8xf32>
    %66 = vector.extract_strided_slice %17 {offsets = [0, 0, 16], sizes = [2, 8, 8], strides = [1, 1, 1]} : vector<2x8x32xf32> to vector<2x8x8xf32>
    %67 = vector.extract_strided_slice %18 {offsets = [0, 0, 16], sizes = [2, 8, 8], strides = [1, 1, 1]} : vector<2x8x32xf32> to vector<2x8x8xf32>
    %68 = vector.extract_strided_slice %19 {offsets = [0, 0, 16], sizes = [2, 8, 8], strides = [1, 1, 1]} : vector<2x8x32xf32> to vector<2x8x8xf32>
    "tpu.trace_start"() <{level = 10 : i32, message = "bqd,bkd->bqk"}> : () -> ()
    %cst_24 = arith.constant dense<0.000000e+00> : vector<2x8x8xf32>
    %69 = tpu.matmul %66, %67, %cst_24 {dimension_numbers = #tpu.dot_dimension_numbers<[2], [2], [1], [1], [0, 0, 0, 1, 1, 1], [0], [0]>} : vector<2x8x8xf32>, vector<2x8x8xf32>, vector<2x8x8xf32> -> vector<2x8x8xf32>
    "tpu.trace_stop"() : () -> ()
    %cst_25 = arith.constant dense<0xFF800000> : vector<2x8xf32>
    %70 = vector.multi_reduction <maximumf>, %69, %cst_25 [2] : vector<2x8x8xf32> to vector<2x8xf32>
    %71 = vector.shape_cast %70 : vector<2x8xf32> to vector<2x8x1xf32>
    %72 = vector.broadcast %71 : vector<2x8x1xf32> to vector<2x8x8xf32>
    %73 = arith.subf %69, %72 : vector<2x8x8xf32>
    %74 = math.exp %73 : vector<2x8x8xf32>
    %cst_26 = arith.constant dense<0.000000e+00> : vector<2x8xf32>
    %75 = vector.multi_reduction <add>, %74, %cst_26 [2] : vector<2x8x8xf32> to vector<2x8xf32>
    %76 = vector.shape_cast %75 : vector<2x8xf32> to vector<2x8x1xf32>
    %77 = tpu.reciprocal %76 {approx = true} : vector<2x8x1xf32> -> vector<2x8x1xf32>
    %78 = vector.broadcast %77 : vector<2x8x1xf32> to vector<2x8x8xf32>
    %79 = arith.mulf %74, %78 : vector<2x8x8xf32>
    "tpu.trace_start"() <{level = 10 : i32, message = "bqk,bkd->bqd"}> : () -> ()
    %cst_27 = arith.constant dense<0.000000e+00> : vector<2x8x8xf32>
    %80 = tpu.matmul %79, %68, %cst_27 {dimension_numbers = #tpu.dot_dimension_numbers<[2], [1], [1], [2], [0, 0, 0, 1, 1, 2], [0], [0]>} : vector<2x8x8xf32>, vector<2x8x8xf32>, vector<2x8x8xf32> -> vector<2x8x8xf32>
    "tpu.trace_stop"() : () -> ()
    %81 = vector.extract_strided_slice %80 {offsets = [0, 0, 0], sizes = [2, 1, 8], strides = [1, 1, 1]} : vector<2x8x8xf32> to vector<2x1x8xf32>
    %82 = vector.extract_strided_slice %80 {offsets = [0, 1, 0], sizes = [2, 1, 8], strides = [1, 1, 1]} : vector<2x8x8xf32> to vector<2x1x8xf32>
    %83 = vector.extract_strided_slice %80 {offsets = [0, 2, 0], sizes = [2, 1, 8], strides = [1, 1, 1]} : vector<2x8x8xf32> to vector<2x1x8xf32>
    %84 = vector.extract_strided_slice %80 {offsets = [0, 3, 0], sizes = [2, 1, 8], strides = [1, 1, 1]} : vector<2x8x8xf32> to vector<2x1x8xf32>
    %85 = vector.extract_strided_slice %80 {offsets = [0, 4, 0], sizes = [2, 1, 8], strides = [1, 1, 1]} : vector<2x8x8xf32> to vector<2x1x8xf32>
    %86 = vector.extract_strided_slice %80 {offsets = [0, 5, 0], sizes = [2, 1, 8], strides = [1, 1, 1]} : vector<2x8x8xf32> to vector<2x1x8xf32>
    %87 = vector.extract_strided_slice %80 {offsets = [0, 6, 0], sizes = [2, 1, 8], strides = [1, 1, 1]} : vector<2x8x8xf32> to vector<2x1x8xf32>
    %88 = vector.extract_strided_slice %80 {offsets = [0, 7, 0], sizes = [2, 1, 8], strides = [1, 1, 1]} : vector<2x8x8xf32> to vector<2x1x8xf32>
    %89 = vector.extract_strided_slice %17 {offsets = [0, 0, 24], sizes = [2, 8, 8], strides = [1, 1, 1]} : vector<2x8x32xf32> to vector<2x8x8xf32>
    %90 = vector.extract_strided_slice %18 {offsets = [0, 0, 24], sizes = [2, 8, 8], strides = [1, 1, 1]} : vector<2x8x32xf32> to vector<2x8x8xf32>
    %91 = vector.extract_strided_slice %19 {offsets = [0, 0, 24], sizes = [2, 8, 8], strides = [1, 1, 1]} : vector<2x8x32xf32> to vector<2x8x8xf32>
    "tpu.trace_start"() <{level = 10 : i32, message = "bqd,bkd->bqk"}> : () -> ()
    %cst_28 = arith.constant dense<0.000000e+00> : vector<2x8x8xf32>
    %92 = tpu.matmul %89, %90, %cst_28 {dimension_numbers = #tpu.dot_dimension_numbers<[2], [2], [1], [1], [0, 0, 0, 1, 1, 1], [0], [0]>} : vector<2x8x8xf32>, vector<2x8x8xf32>, vector<2x8x8xf32> -> vector<2x8x8xf32>
    "tpu.trace_stop"() : () -> ()
    %cst_29 = arith.constant dense<0xFF800000> : vector<2x8xf32>
    %93 = vector.multi_reduction <maximumf>, %92, %cst_29 [2] : vector<2x8x8xf32> to vector<2x8xf32>
    %94 = vector.shape_cast %93 : vector<2x8xf32> to vector<2x8x1xf32>
    %95 = vector.broadcast %94 : vector<2x8x1xf32> to vector<2x8x8xf32>
    %96 = arith.subf %92, %95 : vector<2x8x8xf32>
    %97 = math.exp %96 : vector<2x8x8xf32>
    %cst_30 = arith.constant dense<0.000000e+00> : vector<2x8xf32>
    %98 = vector.multi_reduction <add>, %97, %cst_30 [2] : vector<2x8x8xf32> to vector<2x8xf32>
    %99 = vector.shape_cast %98 : vector<2x8xf32> to vector<2x8x1xf32>
    %100 = tpu.reciprocal %99 {approx = true} : vector<2x8x1xf32> -> vector<2x8x1xf32>
    %101 = vector.broadcast %100 : vector<2x8x1xf32> to vector<2x8x8xf32>
    %102 = arith.mulf %97, %101 : vector<2x8x8xf32>
    "tpu.trace_start"() <{level = 10 : i32, message = "bqk,bkd->bqd"}> : () -> ()
    %cst_31 = arith.constant dense<0.000000e+00> : vector<2x8x8xf32>
    %103 = tpu.matmul %102, %91, %cst_31 {dimension_numbers = #tpu.dot_dimension_numbers<[2], [1], [1], [2], [0, 0, 0, 1, 1, 2], [0], [0]>} : vector<2x8x8xf32>, vector<2x8x8xf32>, vector<2x8x8xf32> -> vector<2x8x8xf32>
    "tpu.trace_stop"() : () -> ()
    %104 = vector.extract_strided_slice %103 {offsets = [0, 0, 0], sizes = [2, 1, 8], strides = [1, 1, 1]} : vector<2x8x8xf32> to vector<2x1x8xf32>
    %105 = vector.extract_strided_slice %103 {offsets = [0, 1, 0], sizes = [2, 1, 8], strides = [1, 1, 1]} : vector<2x8x8xf32> to vector<2x1x8xf32>
    %106 = vector.extract_strided_slice %103 {offsets = [0, 2, 0], sizes = [2, 1, 8], strides = [1, 1, 1]} : vector<2x8x8xf32> to vector<2x1x8xf32>
    %107 = vector.extract_strided_slice %103 {offsets = [0, 3, 0], sizes = [2, 1, 8], strides = [1, 1, 1]} : vector<2x8x8xf32> to vector<2x1x8xf32>
    %108 = vector.extract_strided_slice %103 {offsets = [0, 4, 0], sizes = [2, 1, 8], strides = [1, 1, 1]} : vector<2x8x8xf32> to vector<2x1x8xf32>
    %109 = vector.extract_strided_slice %103 {offsets = [0, 5, 0], sizes = [2, 1, 8], strides = [1, 1, 1]} : vector<2x8x8xf32> to vector<2x1x8xf32>
    %110 = vector.extract_strided_slice %103 {offsets = [0, 6, 0], sizes = [2, 1, 8], strides = [1, 1, 1]} : vector<2x8x8xf32> to vector<2x1x8xf32>
    %111 = vector.extract_strided_slice %103 {offsets = [0, 7, 0], sizes = [2, 1, 8], strides = [1, 1, 1]} : vector<2x8x8xf32> to vector<2x1x8xf32>
    %112 = tpu.concatenate %35, %36, %37, %38 in 2 : vector<2x1x8xf32>, vector<2x1x8xf32>, vector<2x1x8xf32>, vector<2x1x8xf32> -> vector<2x1x32xf32>
    %113 = tpu.concatenate %39, %40, %41, %42 in 2 : vector<2x1x8xf32>, vector<2x1x8xf32>, vector<2x1x8xf32>, vector<2x1x8xf32> -> vector<2x1x32xf32>
    %114 = tpu.concatenate %58, %59, %60, %61 in 2 : vector<2x1x8xf32>, vector<2x1x8xf32>, vector<2x1x8xf32>, vector<2x1x8xf32> -> vector<2x1x32xf32>
    %115 = tpu.concatenate %62, %63, %64, %65 in 2 : vector<2x1x8xf32>, vector<2x1x8xf32>, vector<2x1x8xf32>, vector<2x1x8xf32> -> vector<2x1x32xf32>
    %116 = tpu.concatenate %81, %82, %83, %84 in 2 : vector<2x1x8xf32>, vector<2x1x8xf32>, vector<2x1x8xf32>, vector<2x1x8xf32> -> vector<2x1x32xf32>
    %117 = tpu.concatenate %85, %86, %87, %88 in 2 : vector<2x1x8xf32>, vector<2x1x8xf32>, vector<2x1x8xf32>, vector<2x1x8xf32> -> vector<2x1x32xf32>
    %118 = tpu.concatenate %104, %105, %106, %107 in 2 : vector<2x1x8xf32>, vector<2x1x8xf32>, vector<2x1x8xf32>, vector<2x1x8xf32> -> vector<2x1x32xf32>
    %119 = tpu.concatenate %108, %109, %110, %111 in 2 : vector<2x1x8xf32>, vector<2x1x8xf32>, vector<2x1x8xf32>, vector<2x1x8xf32> -> vector<2x1x32xf32>
    %120 = tpu.concatenate %112, %113, %114, %115, %116, %117, %118, %119 in 1 : vector<2x1x32xf32>, vector<2x1x32xf32>, vector<2x1x32xf32>, vector<2x1x32xf32>, vector<2x1x32xf32>, vector<2x1x32xf32>, vector<2x1x32xf32>, vector<2x1x32xf32> -> vector<2x8x32xf32>
    %121 = vector.shape_cast %120 : vector<2x8x32xf32> to vector<16x32xf32>
    %c0_32 = arith.constant 0 : index
    %c0_33 = arith.constant 0 : index
    %122 = vector.load %arg10[%c0_32, %c0_33] : memref<1x32xf32, #tpu.memory_space<vmem>>, vector<1x32xf32>
    %c0_34 = arith.constant 0 : index
    %c0_35 = arith.constant 0 : index
    %123 = vector.load %arg11[%c0_34, %c0_35] : memref<1x32xf32, #tpu.memory_space<vmem>>, vector<1x32xf32>
    %c0_36 = arith.constant 0 : index
    %c0_37 = arith.constant 0 : index
    %124 = vector.load %arg8[%c0_36, %c0_37] : memref<32x32xf32, #tpu.memory_space<vmem>>, vector<32x32xf32>
    %cst_38 = arith.constant dense<0.000000e+00> : vector<16x32xf32>
    %125 = tpu.matmul %121, %124, %cst_38 {dimension_numbers = #tpu.dot_dimension_numbers<[1], [0], [0], [1], [0, 0, 1, 1], [], []>} : vector<16x32xf32>, vector<32x32xf32>, vector<16x32xf32> -> vector<16x32xf32>
    %c0_39 = arith.constant 0 : index
    %c0_40 = arith.constant 0 : index
    %126 = vector.load %arg9[%c0_39, %c0_40] : memref<1x32xf32, #tpu.memory_space<vmem>>, vector<1x32xf32>
    %127 = vector.broadcast %126 : vector<1x32xf32> to vector<16x32xf32>
    %128 = arith.addf %125, %127 : vector<16x32xf32>
    %129 = arith.addf %1, %128 : vector<16x32xf32>
    %cst_41 = arith.constant dense<0.000000e+00> : vector<16xf32>
    %130 = vector.multi_reduction <add>, %129, %cst_41 [1] : vector<16x32xf32> to vector<16xf32>
    %131 = vector.shape_cast %130 : vector<16xf32> to vector<16x1xf32>
    %cst_42 = arith.constant 3.200000e+01 : f32
    %132 = vector.broadcast %cst_42 : f32 to vector<16x1xf32>
    %133 = arith.divf %131, %132 : vector<16x1xf32>
    %134 = vector.broadcast %133 : vector<16x1xf32> to vector<16x32xf32>
    %135 = arith.subf %129, %134 : vector<16x32xf32>
    %136 = arith.mulf %135, %135 : vector<16x32xf32>
    %cst_43 = arith.constant dense<0.000000e+00> : vector<16xf32>
    %137 = vector.multi_reduction <add>, %136, %cst_43 [1] : vector<16x32xf32> to vector<16xf32>
    %138 = vector.shape_cast %137 : vector<16xf32> to vector<16x1xf32>
    %cst_44 = arith.constant 3.200000e+01 : f32
    %139 = vector.broadcast %cst_44 : f32 to vector<16x1xf32>
    %140 = arith.divf %138, %139 : vector<16x1xf32>
    %141 = vector.broadcast %133 : vector<16x1xf32> to vector<16x32xf32>
    %142 = arith.subf %129, %141 : vector<16x32xf32>
    %cst_45 = arith.constant 9.99999974E-6 : f32
    %143 = vector.broadcast %cst_45 : f32 to vector<16x1xf32>
    %144 = arith.addf %140, %143 : vector<16x1xf32>
    %145 = math.rsqrt %144 : vector<16x1xf32>
    %146 = vector.broadcast %145 : vector<16x1xf32> to vector<16x32xf32>
    %147 = arith.mulf %142, %146 : vector<16x32xf32>
    %148 = vector.broadcast %122 : vector<1x32xf32> to vector<16x32xf32>
    %149 = arith.mulf %147, %148 : vector<16x32xf32>
    %150 = vector.broadcast %123 : vector<1x32xf32> to vector<16x32xf32>
    %151 = arith.addf %149, %150 : vector<16x32xf32>
    %c0_46 = arith.constant 0 : index
    %c0_47 = arith.constant 0 : index
    %152 = vector.load %arg12[%c0_46, %c0_47] : memref<32x128xf32, #tpu.memory_space<vmem>>, vector<32x128xf32>
    %cst_48 = arith.constant dense<0.000000e+00> : vector<16x128xf32>
    %153 = tpu.matmul %151, %152, %cst_48 {dimension_numbers = #tpu.dot_dimension_numbers<[1], [0], [0], [1], [0, 0, 1, 1], [], []>} : vector<16x32xf32>, vector<32x128xf32>, vector<16x128xf32> -> vector<16x128xf32>
    %c0_49 = arith.constant 0 : index
    %c0_50 = arith.constant 0 : index
    %154 = vector.load %arg13[%c0_49, %c0_50] : memref<1x128xf32, #tpu.memory_space<vmem>>, vector<1x128xf32>
    %155 = vector.broadcast %154 : vector<1x128xf32> to vector<16x128xf32>
    %156 = arith.addf %153, %155 : vector<16x128xf32>
    %cst_51 = arith.constant 0.000000e+00 : f32
    %157 = vector.broadcast %cst_51 : f32 to vector<16x128xf32>
    %158 = arith.maximumf %156, %157 : vector<16x128xf32>
    %c0_52 = arith.constant 0 : index
    %c0_53 = arith.constant 0 : index
    %159 = vector.load %arg14[%c0_52, %c0_53] : memref<128x32xf32, #tpu.memory_space<vmem>>, vector<128x32xf32>
    %cst_54 = arith.constant dense<0.000000e+00> : vector<16x32xf32>
    %160 = tpu.matmul %158, %159, %cst_54 {dimension_numbers = #tpu.dot_dimension_numbers<[1], [0], [0], [1], [0, 0, 1, 1], [], []>} : vector<16x128xf32>, vector<128x32xf32>, vector<16x32xf32> -> vector<16x32xf32>
    %c0_55 = arith.constant 0 : index
    %c0_56 = arith.constant 0 : index
    %161 = vector.load %arg15[%c0_55, %c0_56] : memref<1x32xf32, #tpu.memory_space<vmem>>, vector<1x32xf32>
    %162 = vector.broadcast %161 : vector<1x32xf32> to vector<16x32xf32>
    %163 = arith.addf %160, %162 : vector<16x32xf32>
    %164 = arith.addf %151, %163 : vector<16x32xf32>
    %cst_57 = arith.constant dense<0.000000e+00> : vector<16xf32>
    %165 = vector.multi_reduction <add>, %164, %cst_57 [1] : vector<16x32xf32> to vector<16xf32>
    %166 = vector.shape_cast %165 : vector<16xf32> to vector<16x1xf32>
    %cst_58 = arith.constant 3.200000e+01 : f32
    %167 = vector.broadcast %cst_58 : f32 to vector<16x1xf32>
    %168 = arith.divf %166, %167 : vector<16x1xf32>
    %169 = vector.broadcast %168 : vector<16x1xf32> to vector<16x32xf32>
    %170 = arith.subf %164, %169 : vector<16x32xf32>
    %171 = arith.mulf %170, %170 : vector<16x32xf32>
    %cst_59 = arith.constant dense<0.000000e+00> : vector<16xf32>
    %172 = vector.multi_reduction <add>, %171, %cst_59 [1] : vector<16x32xf32> to vector<16xf32>
    %173 = vector.shape_cast %172 : vector<16xf32> to vector<16x1xf32>
    %cst_60 = arith.constant 3.200000e+01 : f32
    %174 = vector.broadcast %cst_60 : f32 to vector<16x1xf32>
    %175 = arith.divf %173, %174 : vector<16x1xf32>
    %176 = vector.broadcast %168 : vector<16x1xf32> to vector<16x32xf32>
    %177 = arith.subf %164, %176 : vector<16x32xf32>
    %cst_61 = arith.constant 9.99999974E-6 : f32
    %178 = vector.broadcast %cst_61 : f32 to vector<16x1xf32>
    %179 = arith.addf %175, %178 : vector<16x1xf32>
    %180 = math.rsqrt %179 : vector<16x1xf32>
    %181 = vector.broadcast %180 : vector<16x1xf32> to vector<16x32xf32>
    %182 = arith.mulf %177, %181 : vector<16x32xf32>
    %183 = vector.broadcast %122 : vector<1x32xf32> to vector<16x32xf32>
    %184 = arith.mulf %182, %183 : vector<16x32xf32>
    %185 = vector.broadcast %123 : vector<1x32xf32> to vector<16x32xf32>
    %186 = arith.addf %184, %185 : vector<16x32xf32>
    %187 = vector.shape_cast %186 : vector<16x32xf32> to vector<2x8x32xf32>
    %c0_62 = arith.constant 0 : index
    %c0_63 = arith.constant 0 : index
    %c0_64 = arith.constant 0 : index
    %188 = vector.load %arg16[%c0_62, %c0_63, %c0_64] : memref<2x8x32xf32, #tpu.memory_space<vmem>>, vector<2x8x32xf32>
    tpu.vector_store %arg16[%c0_62, %c0_63, %c0_64], %187 {strides = array<i32>} : memref<2x8x32xf32, #tpu.memory_space<vmem>>, vector<2x8x32xf32>,
    return
  }
  func.func @transform_0(%arg0: i32) -> (i32, i32, i32) {
    %c0_i32 = arith.constant 0 : i32
    %c0_i32_0 = arith.constant 0 : i32
    %c0_i32_1 = arith.constant 0 : i32
    return %arg0, %c0_i32, %c0_i32_0 : i32, i32, i32
  }
  func.func @transform_1(%arg0: i32) -> (i32, i32) {
    %c0_i32 = arith.constant 0 : i32
    %c0_i32_0 = arith.constant 0 : i32
    %c0_i32_1 = arith.constant 0 : i32
    return %c0_i32, %c0_i32_0 : i32, i32
  }
  func.func @transform_2(%arg0: i32) -> (i32, i32) {
    %c0_i32 = arith.constant 0 : i32
    %c0_i32_0 = arith.constant 0 : i32
    %c0_i32_1 = arith.constant 0 : i32
    return %c0_i32, %c0_i32_0 : i32, i32
  }
  func.func @transform_3(%arg0: i32) -> (i32, i32) {
    %c0_i32 = arith.constant 0 : i32
    %c0_i32_0 = arith.constant 0 : i32
    %c0_i32_1 = arith.constant 0 : i32
    return %c0_i32, %c0_i32_0 : i32, i32
  }
  func.func @transform_4(%arg0: i32) -> (i32, i32) {
    %c0_i32 = arith.constant 0 : i32
    %c0_i32_0 = arith.constant 0 : i32
    %c0_i32_1 = arith.constant 0 : i32
    return %c0_i32, %c0_i32_0 : i32, i32
  }
  func.func @transform_5(%arg0: i32) -> (i32, i32) {
    %c0_i32 = arith.constant 0 : i32
    %c0_i32_0 = arith.constant 0 : i32
    %c0_i32_1 = arith.constant 0 : i32
    return %c0_i32, %c0_i32_0 : i32, i32
  }
  func.func @transform_6(%arg0: i32) -> (i32, i32) {
    %c0_i32 = arith.constant 0 : i32
    %c0_i32_0 = arith.constant 0 : i32
    %c0_i32_1 = arith.constant 0 : i32
    return %c0_i32, %c0_i32_0 : i32, i32
  }
  func.func @transform_7(%arg0: i32) -> (i32, i32) {
    %c0_i32 = arith.constant 0 : i32
    %c0_i32_0 = arith.constant 0 : i32
    %c0_i32_1 = arith.constant 0 : i32
    return %c0_i32, %c0_i32_0 : i32, i32
  }
  func.func @transform_8(%arg0: i32) -> (i32, i32) {
    %c0_i32 = arith.constant 0 : i32
    %c0_i32_0 = arith.constant 0 : i32
    %c0_i32_1 = arith.constant 0 : i32
    return %c0_i32, %c0_i32_0 : i32, i32
  }
  func.func @transform_9(%arg0: i32) -> (i32, i32) {
    %c0_i32 = arith.constant 0 : i32
    %c0_i32_0 = arith.constant 0 : i32
    %c0_i32_1 = arith.constant 0 : i32
    return %c0_i32, %c0_i32_0 : i32, i32
  }
  func.func @transform_10(%arg0: i32) -> (i32, i32) {
    %c0_i32 = arith.constant 0 : i32
    %c0_i32_0 = arith.constant 0 : i32
    %c0_i32_1 = arith.constant 0 : i32
    return %c0_i32, %c0_i32_0 : i32, i32
  }
  func.func @transform_11(%arg0: i32) -> (i32, i32) {
    %c0_i32 = arith.constant 0 : i32
    %c0_i32_0 = arith.constant 0 : i32
    %c0_i32_1 = arith.constant 0 : i32
    return %c0_i32, %c0_i32_0 : i32, i32
  }
  func.func @transform_12(%arg0: i32) -> (i32, i32) {
    %c0_i32 = arith.constant 0 : i32
    %c0_i32_0 = arith.constant 0 : i32
    %c0_i32_1 = arith.constant 0 : i32
    return %c0_i32, %c0_i32_0 : i32, i32
  }
  func.func @transform_13(%arg0: i32) -> (i32, i32) {
    %c0_i32 = arith.constant 0 : i32
    %c0_i32_0 = arith.constant 0 : i32
    %c0_i32_1 = arith.constant 0 : i32
    return %c0_i32, %c0_i32_0 : i32, i32
  }
  func.func @transform_14(%arg0: i32) -> (i32, i32) {
    %c0_i32 = arith.constant 0 : i32
    %c0_i32_0 = arith.constant 0 : i32
    %c0_i32_1 = arith.constant 0 : i32
    return %c0_i32, %c0_i32_0 : i32, i32
  }
  func.func @transform_15(%arg0: i32) -> (i32, i32, i32) {
    %c0_i32 = arith.constant 0 : i32
    %c0_i32_0 = arith.constant 0 : i32
    %c0_i32_1 = arith.constant 0 : i32
    return %arg0, %c0_i32, %c0_i32_0 : i32, i32, i32
  }
}

</mosaic_0001>

<llo_original>
// kernel: tpu_custom_call.1
$region0: #{tpu_custom_call.1}
  #allocation0 [shape = 'u32[]', space=smem, size = 0x4, offset = 0x4, fixed_abs, tag = 'smem constant byte address 0x4 - core index']
  #allocation1 [shape = 'u32[144,128]{1,0:T(1,128)}', space=vmem, size = 0x12000, scoped, tag = 'internal scratch']
  %s0 = inlined_call_operand.hbm [shape: f32[2,8,32], index: 0, kind: input, shape index: {}]
  %s1 = inlined_call_operand.vmem [shape: f32[32,32], index: 1, kind: input, shape index: {}]
  %s2 = inlined_call_operand.vmem [shape: f32[1,32], index: 2, kind: input, shape index: {}]
  %s3 = inlined_call_operand.vmem [shape: f32[32,32], index: 3, kind: input, shape index: {}]
  %s4 = inlined_call_operand.vmem [shape: f32[1,32], index: 4, kind: input, shape index: {}]
  %s5 = inlined_call_operand.vmem [shape: f32[32,32], index: 5, kind: input, shape index: {}]
  %s6 = inlined_call_operand.vmem [shape: f32[1,32], index: 6, kind: input, shape index: {}]
  %s7 = inlined_call_operand.vmem [shape: f32[32,32], index: 7, kind: input, shape index: {}]
  %s8 = inlined_call_operand.vmem [shape: f32[1,32], index: 8, kind: input, shape index: {}]
  %s9 = inlined_call_operand.vmem [shape: f32[1,32], index: 9, kind: input, shape index: {}]
  %s10 = inlined_call_operand.vmem [shape: f32[1,32], index: 10, kind: input, shape index: {}]
  %s11 = inlined_call_operand.vmem [shape: f32[32,128], index: 11, kind: input, shape index: {}]
  %s12 = inlined_call_operand.vmem [shape: f32[1,128], index: 12, kind: input, shape index: {}]
  %s13 = inlined_call_operand.vmem [shape: f32[128,32], index: 13, kind: input, shape index: {}]
  %s14 = inlined_call_operand.vmem [shape: f32[1,32], index: 14, kind: input, shape index: {}]
  %s15 = inlined_call_operand.hbm [shape: f32[2,8,32], index: 15, kind: output, shape index: {}]
  %s16 = sld [smem:[#allocation0]]
  $region74: #{tpu_custom_call.1} parent=0
    _
  %s18 = ssub.s32 1, %s16
  %s19 = scalar_select 0, %s18, %s16
  $region1: #{tpu_custom_call.1} parent=0
    #allocation2 [shape = 'u8[8192]{0}', space=vmem, size = 0x2000, scoped, tag = 'input window, operand 0, single buffered']
    #allocation3 [shape = 's32[1]{0}', space=sflag, size = 0x4, scoped, tag = 'scoped memory for tpu_custom_call.1']
    #allocation4 [shape = 's32[1]{0}', space=sflag, size = 0x4, scoped, tag = 'scoped memory for tpu_custom_call.1']
    #allocation5 [shape = 'u8[8192]{0}', space=vmem, size = 0x2000, scoped, tag = 'output window, operand 0, single buffered']
    %20 = vsyncpa [#allocation3], 0
    %21 = vsyncpa [#allocation4], 0
    // Predicated region
    $region2: #{tpu_custom_call.1} parent=1 // pred_check
      _
    $region3: #{tpu_custom_call.1} parent=1 // pred_check_branch
      %23 = sbr.rel (0) target = $region5
    $region4: #{tpu_custom_call.1} parent=1 // pred_region
      %s25 = ssub.s32 256, 256
      %26 = vsyncadd [#allocation3], %s25
      %s27 = sshll.u32 [#allocation2], 4
      %s28 = int_to_ptr.vmem [resolvable:$true] %s27
      %33 = dma.hbm_to_vmem [thread:$0]  %s0, 256, %s28, [#allocation3], 128, 128, 8
    $region5: #{tpu_custom_call.1} parent=1 // pred_fallthru
      _
    // Predicated region
    $region6: #{tpu_custom_call.1} parent=1 // pred_check
      _
    $region7: #{tpu_custom_call.1} parent=1 // pred_check_branch
      %35 = sbr.rel (0) target = $region9
    $region8: #{tpu_custom_call.1} parent=1 // pred_region
      _
    $region9: #{tpu_custom_call.1} parent=1 // pred_fallthru
      _
    // Predicated region
    $region10: #{tpu_custom_call.1} parent=1 // pred_check
      _
    $region11: #{tpu_custom_call.1} parent=1 // pred_check_branch
      %37 = sbr.rel (0) target = $region13
    $region12: #{tpu_custom_call.1} parent=1 // pred_region
      _
    $region13: #{tpu_custom_call.1} parent=1 // pred_fallthru
      _
    // Predicated region
    $region14: #{tpu_custom_call.1} parent=1 // pred_check
      _
    $region15: #{tpu_custom_call.1} parent=1 // pred_check_branch
      %39 = sbr.rel (0) target = $region17
    $region16: #{tpu_custom_call.1} parent=1 // pred_region
      _
    $region17: #{tpu_custom_call.1} parent=1 // pred_fallthru
      _
    // Predicated region
    $region18: #{tpu_custom_call.1} parent=1 // pred_check
      _
    $region19: #{tpu_custom_call.1} parent=1 // pred_check_branch
      %41 = sbr.rel (0) target = $region21
    $region20: #{tpu_custom_call.1} parent=1 // pred_region
      _
    $region21: #{tpu_custom_call.1} parent=1 // pred_fallthru
      _
    // Predicated region
    $region22: #{tpu_custom_call.1} parent=1 // pred_check
      _
    $region23: #{tpu_custom_call.1} parent=1 // pred_check_branch
      %43 = sbr.rel (0) target = $region25
    $region24: #{tpu_custom_call.1} parent=1 // pred_region
      _
    $region25: #{tpu_custom_call.1} parent=1 // pred_fallthru
      _
    // Predicated region
    $region26: #{tpu_custom_call.1} parent=1 // pred_check
      _
    $region27: #{tpu_custom_call.1} parent=1 // pred_check_branch
      %45 = sbr.rel (0) target = $region29
    $region28: #{tpu_custom_call.1} parent=1 // pred_region
      _
    $region29: #{tpu_custom_call.1} parent=1 // pred_fallthru
      _
    // Predicated region
    $region30: #{tpu_custom_call.1} parent=1 // pred_check
      _
    $region31: #{tpu_custom_call.1} parent=1 // pred_check_branch
      %47 = sbr.rel (0) target = $region33
    $region32: #{tpu_custom_call.1} parent=1 // pred_region
      _
    $region33: #{tpu_custom_call.1} parent=1 // pred_fallthru
      _
    // Predicated region
    $region34: #{tpu_custom_call.1} parent=1 // pred_check
      _
    $region35: #{tpu_custom_call.1} parent=1 // pred_check_branch
      %49 = sbr.rel (0) target = $region37
    $region36: #{tpu_custom_call.1} parent=1 // pred_region
      _
    $region37: #{tpu_custom_call.1} parent=1 // pred_fallthru
      _
    // Predicated region
    $region38: #{tpu_custom_call.1} parent=1 // pred_check
      _
    $region39: #{tpu_custom_call.1} parent=1 // pred_check_branch
      %51 = sbr.rel (0) target = $region41
    $region40: #{tpu_custom_call.1} parent=1 // pred_region
      _
    $region41: #{tpu_custom_call.1} parent=1 // pred_fallthru
      _
    // Predicated region
    $region42: #{tpu_custom_call.1} parent=1 // pred_check
      _
    $region43: #{tpu_custom_call.1} parent=1 // pred_check_branch
      %53 = sbr.rel (0) target = $region45
    $region44: #{tpu_custom_call.1} parent=1 // pred_region
      _
    $region45: #{tpu_custom_call.1} parent=1 // pred_fallthru
      _
    // Predicated region
    $region46: #{tpu_custom_call.1} parent=1 // pred_check
      _
    $region47: #{tpu_custom_call.1} parent=1 // pred_check_branch
      %55 = sbr.rel (0) target = $region49
    $region48: #{tpu_custom_call.1} parent=1 // pred_region
      _
    $region49: #{tpu_custom_call.1} parent=1 // pred_fallthru
      _
    // Predicated region
    $region50: #{tpu_custom_call.1} parent=1 // pred_check
      _
    $region51: #{tpu_custom_call.1} parent=1 // pred_check_branch
      %57 = sbr.rel (0) target = $region53
    $region52: #{tpu_custom_call.1} parent=1 // pred_region
      _
    $region53: #{tpu_custom_call.1} parent=1 // pred_fallthru
      _
    // Predicated region
    $region54: #{tpu_custom_call.1} parent=1 // pred_check
      _
    $region55: #{tpu_custom_call.1} parent=1 // pred_check_branch
      %59 = sbr.rel (0) target = $region57
    $region56: #{tpu_custom_call.1} parent=1 // pred_region
      _
    $region57: #{tpu_custom_call.1} parent=1 // pred_fallthru
      _
    // Predicated region
    $region58: #{tpu_custom_call.1} parent=1 // pred_check
      _
    $region59: #{tpu_custom_call.1} parent=1 // pred_check_branch
      %61 = sbr.rel (0) target = $region61
    $region60: #{tpu_custom_call.1} parent=1 // pred_region
      _
    $region61: #{tpu_custom_call.1} parent=1 // pred_fallthru
      _
    // Predicated region
    $region62: #{tpu_custom_call.1} parent=1 // pred_check
      _
    $region63: #{tpu_custom_call.1} parent=1 // pred_check_branch
      %63 = sbr.rel (0) target = $region65
    $region64: #{tpu_custom_call.1} parent=1 // pred_region
      %64 = dma.done [#allocation3], 256
    $region65: #{tpu_custom_call.1} parent=1 // pred_fallthru
      _
    %v65 = vld [vmem:[#allocation2] sm:$0xff]
    %v66 = vld [vmem:[#allocation2 + $0x8] sm:$0xff]
    %v67 = vld [vmem:[%s1] sm:$0xff]
    %v68 = vld [vmem:[%s1 + $0x8] sm:$0xff]
    %v69 = vld [vmem:[%s1 + $0x10] sm:$0xff]
    %v70 = vld [vmem:[%s1 + $0x18] sm:$0xff]
    %v71 = vld [vmem:[%s2] sm:$0x1]
    %v73 = vlaneseq
    %v74 = vshrl.u32 %v73, 7
    %v75 = vsub.s32 0, %v74
    %v76 = vrot.slane %v71, %v75
    %vm78 = vcmask 261120
    %v80 = vsel %vm78, %v65, 0
    %v83 = vsel %vm78, %v66, 0
    %85 = vmatprep.subr.mxu0 0.0
    %86 = vmatpush1.msra.mxu0 %v67
    %87 = vmatprep.subr.mxu0 0.0
    %88 = vmatpush1.msra.mxu0 %v68
    %89 = vmatprep.subr.mxu0 0.0
    %90 = vmatpush1.msra.mxu0 %v69
    %91 = vmatprep.subr.mxu0 0.0
    %92 = vmatpush1.msra.mxu0 %v70
    %93 = vmatprep.subr.mxu0 0.0
    %94 = vmatpush1.msra.mxu0 0.0
    %95 = vmatprep.subr.mxu0 0.0
    %96 = vmatpush1.msra.mxu0 0.0
    %97 = vmatprep.subr.mxu0 0.0
    %98 = vmatpush1.msra.mxu0 0.0
    %99 = vmatprep.subr.mxu0 0.0
    %100 = vmatpush1.msra.mxu0 0.0
    %101 = vmatprep.subr.mxu0 0.0
    %102 = vmatpush1.msra.mxu0 0.0
    %103 = vmatprep.subr.mxu0 0.0
    %104 = vmatpush1.msra.mxu0 0.0
    %105 = vmatprep.subr.mxu0 0.0
    %106 = vmatpush1.msra.mxu0 0.0
    %107 = vmatprep.subr.mxu0 0.0
    %108 = vmatpush1.msra.mxu0 0.0
    %109 = vmatprep.subr.mxu0 0.0
    %110 = vmatpush1.msra.mxu0 0.0
    %111 = vmatprep.subr.mxu0 0.0
    %112 = vmatpush1.msra.mxu0 0.0
    %113 = vmatprep.subr.mxu0 0.0
    %114 = vmatpush1.msra.mxu0 0.0
    %115 = vmatprep.subr.mxu0 0.0
    %116 = vmatpush1.msra.mxu0 0.0
    %117 = vmatprep.subr.mxu0 0.0
    %118 = vmatpush1.msra.mxu0 0.0
    %119 = vmatprep.subr.mxu0 0.0
    %120 = vmatpush1.msra.mxu0 0.0
    %121 = vmatprep.subr.mxu0 0.0
    %122 = vmatpush1.msra.mxu0 0.0
    %123 = vmatprep.subr.mxu0 0.0
    %124 = vmatpush1.msra.mxu0 0.0
    %125 = vmatprep.subr.mxu0 0.0
    %126 = vmatpush1.msra.mxu0 0.0
    %127 = vmatprep.subr.mxu0 0.0
    %128 = vmatpush1.msra.mxu0 0.0
    %129 = vmatprep.subr.mxu0 0.0
    %130 = vmatpush1.msra.mxu0 0.0
    %131 = vmatprep.subr.mxu0 0.0
    %132 = vmatpush1.msra.mxu0 0.0
    %133 = vmatprep.subr.mxu0 0.0
    %134 = vmatpush1.msra.mxu0 0.0
    %135 = vmatprep.subr.mxu0 0.0
    %136 = vmatpush1.msra.mxu0 0.0
    %137 = vmatprep.subr.mxu0 0.0
    %138 = vmatpush1.msra.mxu0 0.0
    %139 = vmatprep.subr.mxu0 0.0
    %140 = vmatpush1.msra.mxu0 0.0
    %141 = vmatprep.subr.mxu0 0.0
    %142 = vmatpush1.msra.mxu0 0.0
    %143 = vmatprep.subr.mxu0 0.0
    %144 = vmatpush1.msra.mxu0 0.0
    %145 = vmatprep.subr.mxu0 0.0
    %146 = vmatpush1.msra.mxu0 0.0
    %147 = vmatprep.subr.mxu0 0.0
    %148 = vmatpush1.msra.mxu0 0.0
    %149 = vmatprep.mubr.f32.mxu0 0.0
    %150 = vmatmul.mubr.f32.gmra.mrb[0].mxu0 %v80
    %v151 = vpop.f32.mrb[0].mxu0
    %v152 = vadd.f32 %v76, %v151
    %v153 = vpop.f32.mrb[0].mxu0
    %154 = vmatprep.mubr.f32.mxu0 0.0
    %155 = vmatmul.mubr.f32.gmra.mrb[0].mxu0 %v83
    %v156 = vpop.f32.mrb[0].mxu0
    %v157 = vadd.f32 %v76, %v156
    %v158 = vpop.f32.mrb[0].mxu0
    %159 = vdwg.mxu0
    %v160 = vld [vmem:[%s3] sm:$0xff]
    %v161 = vld [vmem:[%s3 + $0x8] sm:$0xff]
    %v162 = vld [vmem:[%s3 + $0x10] sm:$0xff]
    %v163 = vld [vmem:[%s3 + $0x18] sm:$0xff]
    %v164 = vld [vmem:[%s4] sm:$0x1]
    %v166 = vlaneseq
    %v167 = vshrl.u32 %v166, 7
    %v168 = vsub.s32 0, %v167
    %v169 = vrot.slane %v164, %v168
    %171 = vmatprep.subr.mxu0 0.0
    %172 = vmatpush1.msra.mxu0 %v160
    %173 = vmatprep.subr.mxu0 0.0
    %174 = vmatpush1.msra.mxu0 %v161
    %175 = vmatprep.subr.mxu0 0.0
    %176 = vmatpush1.msra.mxu0 %v162
    %177 = vmatprep.subr.mxu0 0.0
    %178 = vmatpush1.msra.mxu0 %v163
    %179 = vmatprep.subr.mxu0 0.0
    %180 = vmatpush1.msra.mxu0 0.0
    %181 = vmatprep.subr.mxu0 0.0
    %182 = vmatpush1.msra.mxu0 0.0
    %183 = vmatprep.subr.mxu0 0.0
    %184 = vmatpush1.msra.mxu0 0.0
    %185 = vmatprep.subr.mxu0 0.0
    %186 = vmatpush1.msra.mxu0 0.0
    %187 = vmatprep.subr.mxu0 0.0
    %188 = vmatpush1.msra.mxu0 0.0
    %189 = vmatprep.subr.mxu0 0.0
    %190 = vmatpush1.msra.mxu0 0.0
    %191 = vmatprep.subr.mxu0 0.0
    %192 = vmatpush1.msra.mxu0 0.0
    %193 = vmatprep.subr.mxu0 0.0
    %194 = vmatpush1.msra.mxu0 0.0
    %195 = vmatprep.subr.mxu0 0.0
    %196 = vmatpush1.msra.mxu0 0.0
    %197 = vmatprep.subr.mxu0 0.0
    %198 = vmatpush1.msra.mxu0 0.0
    %199 = vmatprep.subr.mxu0 0.0
    %200 = vmatpush1.msra.mxu0 0.0
    %201 = vmatprep.subr.mxu0 0.0
    %202 = vmatpush1.msra.mxu0 0.0
    %203 = vmatprep.subr.mxu0 0.0
    %204 = vmatpush1.msra.mxu0 0.0
    %205 = vmatprep.subr.mxu0 0.0
    %206 = vmatpush1.msra.mxu0 0.0
    %207 = vmatprep.subr.mxu0 0.0
    %208 = vmatpush1.msra.mxu0 0.0
    %209 = vmatprep.subr.mxu0 0.0
    %210 = vmatpush1.msra.mxu0 0.0
    %211 = vmatprep.subr.mxu0 0.0
    %212 = vmatpush1.msra.mxu0 0.0
    %213 = vmatprep.subr.mxu0 0.0
    %214 = vmatpush1.msra.mxu0 0.0
    %215 = vmatprep.subr.mxu0 0.0
    %216 = vmatpush1.msra.mxu0 0.0
    %217 = vmatprep.subr.mxu0 0.0
    %218 = vmatpush1.msra.mxu0 0.0
    %219 = vmatprep.subr.mxu0 0.0
    %220 = vmatpush1.msra.mxu0 0.0
    %221 = vmatprep.subr.mxu0 0.0
    %222 = vmatpush1.msra.mxu0 0.0
    %223 = vmatprep.subr.mxu0 0.0
    %224 = vmatpush1.msra.mxu0 0.0
    %225 = vmatprep.subr.mxu0 0.0
    %226 = vmatpush1.msra.mxu0 0.0
    %227 = vmatprep.subr.mxu0 0.0
    %228 = vmatpush1.msra.mxu0 0.0
    %229 = vmatprep.subr.mxu0 0.0
    %230 = vmatpush1.msra.mxu0 0.0
    %231 = vmatprep.subr.mxu0 0.0
    %232 = vmatpush1.msra.mxu0 0.0
    %233 = vmatprep.subr.mxu0 0.0
    %234 = vmatpush1.msra.mxu0 0.0
    %235 = vmatprep.mubr.f32.mxu0 0.0
    %236 = vmatmul.mubr.f32.gmra.mrb[0].mxu0 %v80
    %v237 = vpop.f32.mrb[0].mxu0
    %v238 = vadd.f32 %v169, %v237
    %v239 = vpop.f32.mrb[0].mxu0
    %240 = vmatprep.mubr.f32.mxu0 0.0
    %241 = vmatmul.mubr.f32.gmra.mrb[0].mxu0 %v83
    %v242 = vpop.f32.mrb[0].mxu0
    %v243 = vadd.f32 %v169, %v242
    %v244 = vpop.f32.mrb[0].mxu0
    %245 = vdwg.mxu0
    %v246 = vld [vmem:[%s5] sm:$0xff]
    %v247 = vld [vmem:[%s5 + $0x8] sm:$0xff]
    %v248 = vld [vmem:[%s5 + $0x10] sm:$0xff]
    %v249 = vld [vmem:[%s5 + $0x18] sm:$0xff]
    %v250 = vld [vmem:[%s6] sm:$0x1]
    %v252 = vlaneseq
    %v253 = vshrl.u32 %v252, 7
    %v254 = vsub.s32 0, %v253
    %v255 = vrot.slane %v250, %v254
    %257 = vmatprep.subr.mxu0 0.0
    %258 = vmatpush1.msra.mxu0 %v246
    %259 = vmatprep.subr.mxu0 0.0
    %260 = vmatpush1.msra.mxu0 %v247
    %261 = vmatprep.subr.mxu0 0.0
    %262 = vmatpush1.msra.mxu0 %v248
    %263 = vmatprep.subr.mxu0 0.0
    %264 = vmatpush1.msra.mxu0 %v249
    %265 = vmatprep.subr.mxu0 0.0
    %266 = vmatpush1.msra.mxu0 0.0
    %267 = vmatprep.subr.mxu0 0.0
    %268 = vmatpush1.msra.mxu0 0.0
    %269 = vmatprep.subr.mxu0 0.0
    %270 = vmatpush1.msra.mxu0 0.0
    %271 = vmatprep.subr.mxu0 0.0
    %272 = vmatpush1.msra.mxu0 0.0
    %273 = vmatprep.subr.mxu0 0.0
    %274 = vmatpush1.msra.mxu0 0.0
    %275 = vmatprep.subr.mxu0 0.0
    %276 = vmatpush1.msra.mxu0 0.0
    %277 = vmatprep.subr.mxu0 0.0
    %278 = vmatpush1.msra.mxu0 0.0
    %279 = vmatprep.subr.mxu0 0.0
    %280 = vmatpush1.msra.mxu0 0.0
    %281 = vmatprep.subr.mxu0 0.0
    %282 = vmatpush1.msra.mxu0 0.0
    %283 = vmatprep.subr.mxu0 0.0
    %284 = vmatpush1.msra.mxu0 0.0
    %285 = vmatprep.subr.mxu0 0.0
    %286 = vmatpush1.msra.mxu0 0.0
    %287 = vmatprep.subr.mxu0 0.0
    %288 = vmatpush1.msra.mxu0 0.0
    %289 = vmatprep.subr.mxu0 0.0
    %290 = vmatpush1.msra.mxu0 0.0
    %291 = vmatprep.subr.mxu0 0.0
    %292 = vmatpush1.msra.mxu0 0.0
    %293 = vmatprep.subr.mxu0 0.0
    %294 = vmatpush1.msra.mxu0 0.0
    %295 = vmatprep.subr.mxu0 0.0
    %296 = vmatpush1.msra.mxu0 0.0
    %297 = vmatprep.subr.mxu0 0.0
    %298 = vmatpush1.msra.mxu0 0.0
    %299 = vmatprep.subr.mxu0 0.0
    %300 = vmatpush1.msra.mxu0 0.0
    %301 = vmatprep.subr.mxu0 0.0
    %302 = vmatpush1.msra.mxu0 0.0
    %303 = vmatprep.subr.mxu0 0.0
    %304 = vmatpush1.msra.mxu0 0.0
    %305 = vmatprep.subr.mxu0 0.0
    %306 = vmatpush1.msra.mxu0 0.0
    %307 = vmatprep.subr.mxu0 0.0
    %308 = vmatpush1.msra.mxu0 0.0
    %309 = vmatprep.subr.mxu0 0.0
    %310 = vmatpush1.msra.mxu0 0.0
    %311 = vmatprep.subr.mxu0 0.0
    %312 = vmatpush1.msra.mxu0 0.0
    %313 = vmatprep.subr.mxu0 0.0
    %314 = vmatpush1.msra.mxu0 0.0
    %315 = vmatprep.subr.mxu0 0.0
    %316 = vmatpush1.msra.mxu0 0.0
    %317 = vmatprep.subr.mxu0 0.0
    %318 = vmatpush1.msra.mxu0 0.0
    %319 = vmatprep.subr.mxu0 0.0
    %320 = vmatpush1.msra.mxu0 0.0
    %321 = vmatprep.mubr.f32.mxu0 0.0
    %322 = vmatmul.mubr.f32.gmra.mrb[0].mxu0 %v80
    %v323 = vpop.f32.mrb[0].mxu0
    %v324 = vadd.f32 %v255, %v323
    %v325 = vpop.f32.mrb[0].mxu0
    %326 = vmatprep.mubr.f32.mxu0 0.0
    %327 = vmatmul.mubr.f32.gmra.mrb[0].mxu0 %v83
    %v328 = vpop.f32.mrb[0].mxu0
    %v329 = vadd.f32 %v255, %v328
    %v330 = vpop.f32.mrb[0].mxu0
    %331 = vdwg.mxu0
    %vm332 = vcmask 64512
    %v334 = vsel %vm332, %v152, 0
    %v337 = vsel %vm332, %v238, 0
    %339 = vmatprep.subr.mxu0 0.0
    %340 = vmatpush1.xpose.msra.mxu0 %v337
    %341 = vmatprep.subr.mxu0 0.0
    %342 = vmatpush1.xpose.msra.mxu0 0.0
    %343 = vmatprep.subr.mxu0 0.0
    %344 = vmatpush1.xpose.msra.mxu0 0.0
    %345 = vmatprep.subr.mxu0 0.0
    %346 = vmatpush1.xpose.msra.mxu0 0.0
    %347 = vmatprep.subr.mxu0 0.0
    %348 = vmatpush1.xpose.msra.mxu0 0.0
    %349 = vmatprep.subr.mxu0 0.0
    %350 = vmatpush1.xpose.msra.mxu0 0.0
    %351 = vmatprep.subr.mxu0 0.0
    %352 = vmatpush1.xpose.msra.mxu0 0.0
    %353 = vmatprep.subr.mxu0 0.0
    %354 = vmatpush1.xpose.msra.mxu0 0.0
    %355 = vmatprep.subr.mxu0 0.0
    %356 = vmatpush1.xpose.msra.mxu0 0.0
    %357 = vmatprep.subr.mxu0 0.0
    %358 = vmatpush1.xpose.msra.mxu0 0.0
    %359 = vmatprep.subr.mxu0 0.0
    %360 = vmatpush1.xpose.msra.mxu0 0.0
    %361 = vmatprep.subr.mxu0 0.0
    %362 = vmatpush1.xpose.msra.mxu0 0.0
    %363 = vmatprep.subr.mxu0 0.0
    %364 = vmatpush1.xpose.msra.mxu0 0.0
    %365 = vmatprep.subr.mxu0 0.0
    %366 = vmatpush1.xpose.msra.mxu0 0.0
    %367 = vmatprep.subr.mxu0 0.0
    %368 = vmatpush1.xpose.msra.mxu0 0.0
    %369 = vmatprep.subr.mxu0 0.0
    %370 = vmatpush1.xpose.msra.mxu0 0.0
    %371 = vmatprep.subr.mxu0 0.0
    %372 = vmatpush1.xpose.msra.mxu0 0.0
    %373 = vmatprep.subr.mxu0 0.0
    %374 = vmatpush1.xpose.msra.mxu0 0.0
    %375 = vmatprep.subr.mxu0 0.0
    %376 = vmatpush1.xpose.msra.mxu0 0.0
    %377 = vmatprep.subr.mxu0 0.0
    %378 = vmatpush1.xpose.msra.mxu0 0.0
    %379 = vmatprep.subr.mxu0 0.0
    %380 = vmatpush1.xpose.msra.mxu0 0.0
    %381 = vmatprep.subr.mxu0 0.0
    %382 = vmatpush1.xpose.msra.mxu0 0.0
    %383 = vmatprep.subr.mxu0 0.0
    %384 = vmatpush1.xpose.msra.mxu0 0.0
    %385 = vmatprep.subr.mxu0 0.0
    %386 = vmatpush1.xpose.msra.mxu0 0.0
    %387 = vmatprep.subr.mxu0 0.0
    %388 = vmatpush1.xpose.msra.mxu0 0.0
    %389 = vmatprep.subr.mxu0 0.0
    %390 = vmatpush1.xpose.msra.mxu0 0.0
    %391 = vmatprep.subr.mxu0 0.0
    %392 = vmatpush1.xpose.msra.mxu0 0.0
    %393 = vmatprep.subr.mxu0 0.0
    %394 = vmatpush1.xpose.msra.mxu0 0.0
    %395 = vmatprep.subr.mxu0 0.0
    %396 = vmatpush1.xpose.msra.mxu0 0.0
    %397 = vmatprep.subr.mxu0 0.0
    %398 = vmatpush1.xpose.msra.mxu0 0.0
    %399 = vmatprep.subr.mxu0 0.0
    %400 = vmatpush1.xpose.msra.mxu0 0.0
    %401 = vmatprep.subr.mxu0 0.0
    %402 = vmatpush1.xpose.msra.mxu0 0.0
    %403 = vmatprep.mubr.f32.mxu0 0.0
    %404 = vmatmul.mubr.f32.gmra.mrb[0].mxu0 %v334
    %v405 = vpop.f32.mrb[0].mxu0
    %v406 = vadd.f32 0.0, %v405
    %v407 = vpop.f32.mrb[0].mxu0
    %408 = vdwg.mxu0
    %v410 = vsel %vm332, %v157, 0
    %v413 = vsel %vm332, %v243, 0
    %415 = vmatprep.subr.mxu0 0.0
    %416 = vmatpush1.xpose.msra.mxu0 %v413
    %417 = vmatprep.subr.mxu0 0.0
    %418 = vmatpush1.xpose.msra.mxu0 0.0
    %419 = vmatprep.subr.mxu0 0.0
    %420 = vmatpush1.xpose.msra.mxu0 0.0
    %421 = vmatprep.subr.mxu0 0.0
    %422 = vmatpush1.xpose.msra.mxu0 0.0
    %423 = vmatprep.subr.mxu0 0.0
    %424 = vmatpush1.xpose.msra.mxu0 0.0
    %425 = vmatprep.subr.mxu0 0.0
    %426 = vmatpush1.xpose.msra.mxu0 0.0
    %427 = vmatprep.subr.mxu0 0.0
    %428 = vmatpush1.xpose.msra.mxu0 0.0
    %429 = vmatprep.subr.mxu0 0.0
    %430 = vmatpush1.xpose.msra.mxu0 0.0
    %431 = vmatprep.subr.mxu0 0.0
    %432 = vmatpush1.xpose.msra.mxu0 0.0
    %433 = vmatprep.subr.mxu0 0.0
    %434 = vmatpush1.xpose.msra.mxu0 0.0
    %435 = vmatprep.subr.mxu0 0.0
    %436 = vmatpush1.xpose.msra.mxu0 0.0
    %437 = vmatprep.subr.mxu0 0.0
    %438 = vmatpush1.xpose.msra.mxu0 0.0
    %439 = vmatprep.subr.mxu0 0.0
    %440 = vmatpush1.xpose.msra.mxu0 0.0
    %441 = vmatprep.subr.mxu0 0.0
    %442 = vmatpush1.xpose.msra.mxu0 0.0
    %443 = vmatprep.subr.mxu0 0.0
    %444 = vmatpush1.xpose.msra.mxu0 0.0
    %445 = vmatprep.subr.mxu0 0.0
    %446 = vmatpush1.xpose.msra.mxu0 0.0
    %447 = vmatprep.subr.mxu0 0.0
    %448 = vmatpush1.xpose.msra.mxu0 0.0
    %449 = vmatprep.subr.mxu0 0.0
    %450 = vmatpush1.xpose.msra.mxu0 0.0
    %451 = vmatprep.subr.mxu0 0.0
    %452 = vmatpush1.xpose.msra.mxu0 0.0
    %453 = vmatprep.subr.mxu0 0.0
    %454 = vmatpush1.xpose.msra.mxu0 0.0
    %455 = vmatprep.subr.mxu0 0.0
    %456 = vmatpush1.xpose.msra.mxu0 0.0
    %457 = vmatprep.subr.mxu0 0.0
    %458 = vmatpush1.xpose.msra.mxu0 0.0
    %459 = vmatprep.subr.mxu0 0.0
    %460 = vmatpush1.xpose.msra.mxu0 0.0
    %461 = vmatprep.subr.mxu0 0.0
    %462 = vmatpush1.xpose.msra.mxu0 0.0
    %463 = vmatprep.subr.mxu0 0.0
    %464 = vmatpush1.xpose.msra.mxu0 0.0
    %465 = vmatprep.subr.mxu0 0.0
    %466 = vmatpush1.xpose.msra.mxu0 0.0
    %467 = vmatprep.subr.mxu0 0.0
    %468 = vmatpush1.xpose.msra.mxu0 0.0
    %469 = vmatprep.subr.mxu0 0.0
    %470 = vmatpush1.xpose.msra.mxu0 0.0
    %471 = vmatprep.subr.mxu0 0.0
    %472 = vmatpush1.xpose.msra.mxu0 0.0
    %473 = vmatprep.subr.mxu0 0.0
    %474 = vmatpush1.xpose.msra.mxu0 0.0
    %475 = vmatprep.subr.mxu0 0.0
    %476 = vmatpush1.xpose.msra.mxu0 0.0
    %477 = vmatprep.subr.mxu0 0.0
    %478 = vmatpush1.xpose.msra.mxu0 0.0
    %479 = vmatprep.mubr.f32.mxu0 0.0
    %480 = vmatmul.mubr.f32.gmra.mrb[0].mxu0 %v410
    %v481 = vpop.f32.mrb[0].mxu0
    %v482 = vadd.f32 0.0, %v481
    %v483 = vpop.f32.mrb[0].mxu0
    %484 = vdwg.mxu0
    %v485 = vsel %vm332, %v406, -inf
    %486 = vmax.xlane.f32.xlu0 %v485
    %v487 = vpop.xlane.xlu0 %486
    %v488 = vsel %vm332, %v482, -inf
    %489 = vmax.xlane.f32.xlu0 %v488
    %v490 = vpop.xlane.xlu0 %489
    %v491 = vsub.f32 %v406, %v487
    %v492 = vsub.f32 %v482, %v490
    %v493 = vmul.f32 %v491, 1.442695
    %v494 = vpow.pop %v493
    %v495 = vmul.f32 %v492, 1.442695
    %v496 = vpow.pop %v495
    %v497 = vsel %vm332, %v494, 0.0
    %498 = vadd.xlane.f32.xlu0 %v497
    %v499 = vpop.xlane.xlu0 %498
    %v500 = vsel %vm332, %v496, 0.0
    %501 = vadd.xlane.f32.xlu0 %v500
    %v502 = vpop.xlane.xlu0 %501
    %v503 = vrcp.pop %v499
    %v504 = vrcp.pop %v502
    %v505 = vmul.f32 %v494, %v503
    %v506 = vmul.f32 %v496, %v504
    %v508 = vsel %vm332, %v505, 0
    %510 = vmatprep.subr.mxu0 0.0
    %511 = vmatpush1.msra.mxu0 %v324
    %512 = vmatprep.subr.mxu0 0.0
    %513 = vmatpush1.msra.mxu0 0.0
    %514 = vmatprep.subr.mxu0 0.0
    %515 = vmatpush1.msra.mxu0 0.0
    %516 = vmatprep.subr.mxu0 0.0
    %517 = vmatpush1.msra.mxu0 0.0
    %518 = vmatprep.subr.mxu0 0.0
    %519 = vmatpush1.msra.mxu0 0.0
    %520 = vmatprep.subr.mxu0 0.0
    %521 = vmatpush1.msra.mxu0 0.0
    %522 = vmatprep.subr.mxu0 0.0
    %523 = vmatpush1.msra.mxu0 0.0
    %524 = vmatprep.subr.mxu0 0.0
    %525 = vmatpush1.msra.mxu0 0.0
    %526 = vmatprep.subr.mxu0 0.0
    %527 = vmatpush1.msra.mxu0 0.0
    %528 = vmatprep.subr.mxu0 0.0
    %529 = vmatpush1.msra.mxu0 0.0
    %530 = vmatprep.subr.mxu0 0.0
    %531 = vmatpush1.msra.mxu0 0.0
    %532 = vmatprep.subr.mxu0 0.0
    %533 = vmatpush1.msra.mxu0 0.0
    %534 = vmatprep.subr.mxu0 0.0
    %535 = vmatpush1.msra.mxu0 0.0
    %536 = vmatprep.subr.mxu0 0.0
    %537 = vmatpush1.msra.mxu0 0.0
    %538 = vmatprep.subr.mxu0 0.0
    %539 = vmatpush1.msra.mxu0 0.0
    %540 = vmatprep.subr.mxu0 0.0
    %541 = vmatpush1.msra.mxu0 0.0
    %542 = vmatprep.subr.mxu0 0.0
    %543 = vmatpush1.msra.mxu0 0.0
    %544 = vmatprep.subr.mxu0 0.0
    %545 = vmatpush1.msra.mxu0 0.0
    %546 = vmatprep.subr.mxu0 0.0
    %547 = vmatpush1.msra.mxu0 0.0
    %548 = vmatprep.subr.mxu0 0.0
    %549 = vmatpush1.msra.mxu0 0.0
    %550 = vmatprep.subr.mxu0 0.0
    %551 = vmatpush1.msra.mxu0 0.0
    %552 = vmatprep.subr.mxu0 0.0
    %553 = vmatpush1.msra.mxu0 0.0
    %554 = vmatprep.subr.mxu0 0.0
    %555 = vmatpush1.msra.mxu0 0.0
    %556 = vmatprep.subr.mxu0 0.0
    %557 = vmatpush1.msra.mxu0 0.0
    %558 = vmatprep.subr.mxu0 0.0
    %559 = vmatpush1.msra.mxu0 0.0
    %560 = vmatprep.subr.mxu0 0.0
    %561 = vmatpush1.msra.mxu0 0.0
    %562 = vmatprep.subr.mxu0 0.0
    %563 = vmatpush1.msra.mxu0 0.0
    %564 = vmatprep.subr.mxu0 0.0
    %565 = vmatpush1.msra.mxu0 0.0
    %566 = vmatprep.subr.mxu0 0.0
    %567 = vmatpush1.msra.mxu0 0.0
    %568 = vmatprep.subr.mxu0 0.0
    %569 = vmatpush1.msra.mxu0 0.0
    %570 = vmatprep.subr.mxu0 0.0
    %571 = vmatpush1.msra.mxu0 0.0
    %572 = vmatprep.subr.mxu0 0.0
    %573 = vmatpush1.msra.mxu0 0.0
    %574 = vmatprep.mubr.f32.mxu0 0.0
    %575 = vmatmul.mubr.f32.gmra.mrb[0].mxu0 %v508
    %v576 = vpop.f32.mrb[0].mxu0
    %v577 = vadd.f32 0.0, %v576
    %v578 = vpop.f32.mrb[0].mxu0
    %579 = vdwg.mxu0
    %v581 = vsel %vm332, %v506, 0
    %583 = vmatprep.subr.mxu0 0.0
    %584 = vmatpush1.msra.mxu0 %v329
    %585 = vmatprep.subr.mxu0 0.0
    %586 = vmatpush1.msra.mxu0 0.0
    %587 = vmatprep.subr.mxu0 0.0
    %588 = vmatpush1.msra.mxu0 0.0
    %589 = vmatprep.subr.mxu0 0.0
    %590 = vmatpush1.msra.mxu0 0.0
    %591 = vmatprep.subr.mxu0 0.0
    %592 = vmatpush1.msra.mxu0 0.0
    %593 = vmatprep.subr.mxu0 0.0
    %594 = vmatpush1.msra.mxu0 0.0
    %595 = vmatprep.subr.mxu0 0.0
    %596 = vmatpush1.msra.mxu0 0.0
    %597 = vmatprep.subr.mxu0 0.0
    %598 = vmatpush1.msra.mxu0 0.0
    %599 = vmatprep.subr.mxu0 0.0
    %600 = vmatpush1.msra.mxu0 0.0
    %601 = vmatprep.subr.mxu0 0.0
    %602 = vmatpush1.msra.mxu0 0.0
    %603 = vmatprep.subr.mxu0 0.0
    %604 = vmatpush1.msra.mxu0 0.0
    %605 = vmatprep.subr.mxu0 0.0
    %606 = vmatpush1.msra.mxu0 0.0
    %607 = vmatprep.subr.mxu0 0.0
    %608 = vmatpush1.msra.mxu0 0.0
    %609 = vmatprep.subr.mxu0 0.0
    %610 = vmatpush1.msra.mxu0 0.0
    %611 = vmatprep.subr.mxu0 0.0
    %612 = vmatpush1.msra.mxu0 0.0
    %613 = vmatprep.subr.mxu0 0.0
    %614 = vmatpush1.msra.mxu0 0.0
    %615 = vmatprep.subr.mxu0 0.0
    %616 = vmatpush1.msra.mxu0 0.0
    %617 = vmatprep.subr.mxu0 0.0
    %618 = vmatpush1.msra.mxu0 0.0
    %619 = vmatprep.subr.mxu0 0.0
    %620 = vmatpush1.msra.mxu0 0.0
    %621 = vmatprep.subr.mxu0 0.0
    %622 = vmatpush1.msra.mxu0 0.0
    %623 = vmatprep.subr.mxu0 0.0
    %624 = vmatpush1.msra.mxu0 0.0
    %625 = vmatprep.subr.mxu0 0.0
    %626 = vmatpush1.msra.mxu0 0.0
    %627 = vmatprep.subr.mxu0 0.0
    %628 = vmatpush1.msra.mxu0 0.0
    %629 = vmatprep.subr.mxu0 0.0
    %630 = vmatpush1.msra.mxu0 0.0
    %631 = vmatprep.subr.mxu0 0.0
    %632 = vmatpush1.msra.mxu0 0.0
    %633 = vmatprep.subr.mxu0 0.0
    %634 = vmatpush1.msra.mxu0 0.0
    %635 = vmatprep.subr.mxu0 0.0
    %636 = vmatpush1.msra.mxu0 0.0
    %637 = vmatprep.subr.mxu0 0.0
    %638 = vmatpush1.msra.mxu0 0.0
    %639 = vmatprep.subr.mxu0 0.0
    %640 = vmatpush1.msra.mxu0 0.0
    %641 = vmatprep.subr.mxu0 0.0
    %642 = vmatpush1.msra.mxu0 0.0
    %643 = vmatprep.subr.mxu0 0.0
    %644 = vmatpush1.msra.mxu0 0.0
    %645 = vmatprep.subr.mxu0 0.0
    %646 = vmatpush1.msra.mxu0 0.0
    %647 = vmatprep.mubr.f32.mxu0 0.0
    %648 = vmatmul.mubr.f32.gmra.mrb[0].mxu0 %v581
    %v649 = vpop.f32.mrb[0].mxu0
    %v650 = vadd.f32 0.0, %v649
    %v651 = vpop.f32.mrb[0].mxu0
    %652 = vdwg.mxu0
    %653 = vrot.lane.b32.xlu0 %v152, 120
    %v654 = vpop.permute.xlu0 %653
    %655 = vrot.lane.b32.xlu0 %v238, 120
    %v656 = vpop.permute.xlu0 %655
    %v657 = vsel %vm332, %v654, 0
    %v659 = vsel %vm332, %v656, 0
    %661 = vmatprep.subr.mxu0 0.0
    %662 = vmatpush1.xpose.msra.mxu0 %v659
    %663 = vmatprep.subr.mxu0 0.0
    %664 = vmatpush1.xpose.msra.mxu0 0.0
    %665 = vmatprep.subr.mxu0 0.0
    %666 = vmatpush1.xpose.msra.mxu0 0.0
    %667 = vmatprep.subr.mxu0 0.0
    %668 = vmatpush1.xpose.msra.mxu0 0.0
    %669 = vmatprep.subr.mxu0 0.0
    %670 = vmatpush1.xpose.msra.mxu0 0.0
    %671 = vmatprep.subr.mxu0 0.0
    %672 = vmatpush1.xpose.msra.mxu0 0.0
    %673 = vmatprep.subr.mxu0 0.0
    %674 = vmatpush1.xpose.msra.mxu0 0.0
    %675 = vmatprep.subr.mxu0 0.0
    %676 = vmatpush1.xpose.msra.mxu0 0.0
    %677 = vmatprep.subr.mxu0 0.0
    %678 = vmatpush1.xpose.msra.mxu0 0.0
    %679 = vmatprep.subr.mxu0 0.0
    %680 = vmatpush1.xpose.msra.mxu0 0.0
    %681 = vmatprep.subr.mxu0 0.0
    %682 = vmatpush1.xpose.msra.mxu0 0.0
    %683 = vmatprep.subr.mxu0 0.0
    %684 = vmatpush1.xpose.msra.mxu0 0.0
    %685 = vmatprep.subr.mxu0 0.0
    %686 = vmatpush1.xpose.msra.mxu0 0.0
    %687 = vmatprep.subr.mxu0 0.0
    %688 = vmatpush1.xpose.msra.mxu0 0.0
    %689 = vmatprep.subr.mxu0 0.0
    %690 = vmatpush1.xpose.msra.mxu0 0.0
    %691 = vmatprep.subr.mxu0 0.0
    %692 = vmatpush1.xpose.msra.mxu0 0.0
    %693 = vmatprep.subr.mxu0 0.0
    %694 = vmatpush1.xpose.msra.mxu0 0.0
    %695 = vmatprep.subr.mxu0 0.0
    %696 = vmatpush1.xpose.msra.mxu0 0.0
    %697 = vmatprep.subr.mxu0 0.0
    %698 = vmatpush1.xpose.msra.mxu0 0.0
    %699 = vmatprep.subr.mxu0 0.0
    %700 = vmatpush1.xpose.msra.mxu0 0.0
    %701 = vmatprep.subr.mxu0 0.0
    %702 = vmatpush1.xpose.msra.mxu0 0.0
    %703 = vmatprep.subr.mxu0 0.0
    %704 = vmatpush1.xpose.msra.mxu0 0.0
    %705 = vmatprep.subr.mxu0 0.0
    %706 = vmatpush1.xpose.msra.mxu0 0.0
    %707 = vmatprep.subr.mxu0 0.0
    %708 = vmatpush1.xpose.msra.mxu0 0.0
    %709 = vmatprep.subr.mxu0 0.0
    %710 = vmatpush1.xpose.msra.mxu0 0.0
    %711 = vmatprep.subr.mxu0 0.0
    %712 = vmatpush1.xpose.msra.mxu0 0.0
    %713 = vmatprep.subr.mxu0 0.0
    %714 = vmatpush1.xpose.msra.mxu0 0.0
    %715 = vmatprep.subr.mxu0 0.0
    %716 = vmatpush1.xpose.msra.mxu0 0.0
    %717 = vmatprep.subr.mxu0 0.0
    %718 = vmatpush1.xpose.msra.mxu0 0.0
    %719 = vmatprep.subr.mxu0 0.0
    %720 = vmatpush1.xpose.msra.mxu0 0.0
    %721 = vmatprep.subr.mxu0 0.0
    %722 = vmatpush1.xpose.msra.mxu0 0.0
    %723 = vmatprep.subr.mxu0 0.0
    %724 = vmatpush1.xpose.msra.mxu0 0.0
    %725 = vmatprep.mubr.f32.mxu0 0.0
    %726 = vmatmul.mubr.f32.gmra.mrb[0].mxu0 %v657
    %v727 = vpop.f32.mrb[0].mxu0
    %v728 = vadd.f32 0.0, %v727
    %v729 = vpop.f32.mrb[0].mxu0
    %730 = vdwg.mxu0
    %731 = vrot.lane.b32.xlu0 %v157, 120
    %v732 = vpop.permute.xlu0 %731
    %733 = vrot.lane.b32.xlu0 %v243, 120
    %v734 = vpop.permute.xlu0 %733
    %v735 = vsel %vm332, %v732, 0
    %v737 = vsel %vm332, %v734, 0
    %739 = vmatprep.subr.mxu0 0.0
    %740 = vmatpush1.xpose.msra.mxu0 %v737
    %741 = vmatprep.subr.mxu0 0.0
    %742 = vmatpush1.xpose.msra.mxu0 0.0
    %743 = vmatprep.subr.mxu0 0.0
    %744 = vmatpush1.xpose.msra.mxu0 0.0
    %745 = vmatprep.subr.mxu0 0.0
    %746 = vmatpush1.xpose.msra.mxu0 0.0
    %747 = vmatprep.subr.mxu0 0.0
    %748 = vmatpush1.xpose.msra.mxu0 0.0
    %749 = vmatprep.subr.mxu0 0.0
    %750 = vmatpush1.xpose.msra.mxu0 0.0
    %751 = vmatprep.subr.mxu0 0.0
    %752 = vmatpush1.xpose.msra.mxu0 0.0
    %753 = vmatprep.subr.mxu0 0.0
    %754 = vmatpush1.xpose.msra.mxu0 0.0
    %755 = vmatprep.subr.mxu0 0.0
    %756 = vmatpush1.xpose.msra.mxu0 0.0
    %757 = vmatprep.subr.mxu0 0.0
    %758 = vmatpush1.xpose.msra.mxu0 0.0
    %759 = vmatprep.subr.mxu0 0.0
    %760 = vmatpush1.xpose.msra.mxu0 0.0
    %761 = vmatprep.subr.mxu0 0.0
    %762 = vmatpush1.xpose.msra.mxu0 0.0
    %763 = vmatprep.subr.mxu0 0.0
    %764 = vmatpush1.xpose.msra.mxu0 0.0
    %765 = vmatprep.subr.mxu0 0.0
    %766 = vmatpush1.xpose.msra.mxu0 0.0
    %767 = vmatprep.subr.mxu0 0.0
    %768 = vmatpush1.xpose.msra.mxu0 0.0
    %769 = vmatprep.subr.mxu0 0.0
    %770 = vmatpush1.xpose.msra.mxu0 0.0
    %771 = vmatprep.subr.mxu0 0.0
    %772 = vmatpush1.xpose.msra.mxu0 0.0
    %773 = vmatprep.subr.mxu0 0.0
    %774 = vmatpush1.xpose.msra.mxu0 0.0
    %775 = vmatprep.subr.mxu0 0.0
    %776 = vmatpush1.xpose.msra.mxu0 0.0
    %777 = vmatprep.subr.mxu0 0.0
    %778 = vmatpush1.xpose.msra.mxu0 0.0
    %779 = vmatprep.subr.mxu0 0.0
    %780 = vmatpush1.xpose.msra.mxu0 0.0
    %781 = vmatprep.subr.mxu0 0.0
    %782 = vmatpush1.xpose.msra.mxu0 0.0
    %783 = vmatprep.subr.mxu0 0.0
    %784 = vmatpush1.xpose.msra.mxu0 0.0
    %785 = vmatprep.subr.mxu0 0.0
    %786 = vmatpush1.xpose.msra.mxu0 0.0
    %787 = vmatprep.subr.mxu0 0.0
    %788 = vmatpush1.xpose.msra.mxu0 0.0
    %789 = vmatprep.subr.mxu0 0.0
    %790 = vmatpush1.xpose.msra.mxu0 0.0
    %791 = vmatprep.subr.mxu0 0.0
    %792 = vmatpush1.xpose.msra.mxu0 0.0
    %793 = vmatprep.subr.mxu0 0.0
    %794 = vmatpush1.xpose.msra.mxu0 0.0
    %795 = vmatprep.subr.mxu0 0.0
    %796 = vmatpush1.xpose.msra.mxu0 0.0
    %797 = vmatprep.subr.mxu0 0.0
    %798 = vmatpush1.xpose.msra.mxu0 0.0
    %799 = vmatprep.subr.mxu0 0.0
    %800 = vmatpush1.xpose.msra.mxu0 0.0
    %801 = vmatprep.subr.mxu0 0.0
    %802 = vmatpush1.xpose.msra.mxu0 0.0
    %803 = vmatprep.mubr.f32.mxu0 0.0
    %804 = vmatmul.mubr.f32.gmra.mrb[0].mxu0 %v735
    %v805 = vpop.f32.mrb[0].mxu0
    %v806 = vadd.f32 0.0, %v805
    %v807 = vpop.f32.mrb[0].mxu0
    %808 = vdwg.mxu0
    %v809 = vsel %vm332, %v728, -inf
    %810 = vmax.xlane.f32.xlu0 %v809
    %v811 = vpop.xlane.xlu0 %810
    %v812 = vsel %vm332, %v806, -inf
    %813 = vmax.xlane.f32.xlu0 %v812
    %v814 = vpop.xlane.xlu0 %813
    %v815 = vsub.f32 %v728, %v811
    %v816 = vsub.f32 %v806, %v814
    %v817 = vmul.f32 %v815, 1.442695
    %v818 = vpow.pop %v817
    %v819 = vmul.f32 %v816, 1.442695
    %v820 = vpow.pop %v819
    %v821 = vsel %vm332, %v818, 0.0
    %822 = vadd.xlane.f32.xlu0 %v821
    %v823 = vpop.xlane.xlu0 %822
    %v824 = vsel %vm332, %v820, 0.0
    %825 = vadd.xlane.f32.xlu0 %v824
    %v826 = vpop.xlane.xlu0 %825
    %v827 = vrcp.pop %v823
    %v828 = vrcp.pop %v826
    %v829 = vmul.f32 %v818, %v827
    %v830 = vmul.f32 %v820, %v828
    %832 = vrot.lane.b32.xlu0 %v324, 120
    %v833 = vpop.permute.xlu0 %832
    %v836 = vsel %vm332, %v829, 0
    %838 = vmatprep.subr.mxu0 0.0
    %839 = vmatpush1.msra.mxu0 %v833
    %840 = vmatprep.subr.mxu0 0.0
    %841 = vmatpush1.msra.mxu0 0.0
    %842 = vmatprep.subr.mxu0 0.0
    %843 = vmatpush1.msra.mxu0 0.0
    %844 = vmatprep.subr.mxu0 0.0
    %845 = vmatpush1.msra.mxu0 0.0
    %846 = vmatprep.subr.mxu0 0.0
    %847 = vmatpush1.msra.mxu0 0.0
    %848 = vmatprep.subr.mxu0 0.0
    %849 = vmatpush1.msra.mxu0 0.0
    %850 = vmatprep.subr.mxu0 0.0
    %851 = vmatpush1.msra.mxu0 0.0
    %852 = vmatprep.subr.mxu0 0.0
    %853 = vmatpush1.msra.mxu0 0.0
    %854 = vmatprep.subr.mxu0 0.0
    %855 = vmatpush1.msra.mxu0 0.0
    %856 = vmatprep.subr.mxu0 0.0
    %857 = vmatpush1.msra.mxu0 0.0
    %858 = vmatprep.subr.mxu0 0.0
    %859 = vmatpush1.msra.mxu0 0.0
    %860 = vmatprep.subr.mxu0 0.0
    %861 = vmatpush1.msra.mxu0 0.0
    %862 = vmatprep.subr.mxu0 0.0
    %863 = vmatpush1.msra.mxu0 0.0
    %864 = vmatprep.subr.mxu0 0.0
    %865 = vmatpush1.msra.mxu0 0.0
    %866 = vmatprep.subr.mxu0 0.0
    %867 = vmatpush1.msra.mxu0 0.0
    %868 = vmatprep.subr.mxu0 0.0
    %869 = vmatpush1.msra.mxu0 0.0
    %870 = vmatprep.subr.mxu0 0.0
    %871 = vmatpush1.msra.mxu0 0.0
    %872 = vmatprep.subr.mxu0 0.0
    %873 = vmatpush1.msra.mxu0 0.0
    %874 = vmatprep.subr.mxu0 0.0
    %875 = vmatpush1.msra.mxu0 0.0
    %876 = vmatprep.subr.mxu0 0.0
    %877 = vmatpush1.msra.mxu0 0.0
    %878 = vmatprep.subr.mxu0 0.0
    %879 = vmatpush1.msra.mxu0 0.0
    %880 = vmatprep.subr.mxu0 0.0
    %881 = vmatpush1.msra.mxu0 0.0
    %882 = vmatprep.subr.mxu0 0.0
    %883 = vmatpush1.msra.mxu0 0.0
    %884 = vmatprep.subr.mxu0 0.0
    %885 = vmatpush1.msra.mxu0 0.0
    %886 = vmatprep.subr.mxu0 0.0
    %887 = vmatpush1.msra.mxu0 0.0
    %888 = vmatprep.subr.mxu0 0.0
    %889 = vmatpush1.msra.mxu0 0.0
    %890 = vmatprep.subr.mxu0 0.0
    %891 = vmatpush1.msra.mxu0 0.0
    %892 = vmatprep.subr.mxu0 0.0
    %893 = vmatpush1.msra.mxu0 0.0
    %894 = vmatprep.subr.mxu0 0.0
    %895 = vmatpush1.msra.mxu0 0.0
    %896 = vmatprep.subr.mxu0 0.0
    %897 = vmatpush1.msra.mxu0 0.0
    %898 = vmatprep.subr.mxu0 0.0
    %899 = vmatpush1.msra.mxu0 0.0
    %900 = vmatprep.subr.mxu0 0.0
    %901 = vmatpush1.msra.mxu0 0.0
    %902 = vmatprep.mubr.f32.mxu0 0.0
    %903 = vmatmul.mubr.f32.gmra.mrb[0].mxu0 %v836
    %v904 = vpop.f32.mrb[0].mxu0
    %v905 = vadd.f32 0.0, %v904
    %v906 = vpop.f32.mrb[0].mxu0
    %907 = vdwg.mxu0
    %909 = vrot.lane.b32.xlu0 %v329, 120
    %v910 = vpop.permute.xlu0 %909
    %v913 = vsel %vm332, %v830, 0
    %915 = vmatprep.subr.mxu0 0.0
    %916 = vmatpush1.msra.mxu0 %v910
    %917 = vmatprep.subr.mxu0 0.0
    %918 = vmatpush1.msra.mxu0 0.0
    %919 = vmatprep.subr.mxu0 0.0
    %920 = vmatpush1.msra.mxu0 0.0
    %921 = vmatprep.subr.mxu0 0.0
    %922 = vmatpush1.msra.mxu0 0.0
    %923 = vmatprep.subr.mxu0 0.0
    %924 = vmatpush1.msra.mxu0 0.0
    %925 = vmatprep.subr.mxu0 0.0
    %926 = vmatpush1.msra.mxu0 0.0
    %927 = vmatprep.subr.mxu0 0.0
    %928 = vmatpush1.msra.mxu0 0.0
    %929 = vmatprep.subr.mxu0 0.0
    %930 = vmatpush1.msra.mxu0 0.0
    %931 = vmatprep.subr.mxu0 0.0
    %932 = vmatpush1.msra.mxu0 0.0
    %933 = vmatprep.subr.mxu0 0.0
    %934 = vmatpush1.msra.mxu0 0.0
    %935 = vmatprep.subr.mxu0 0.0
    %936 = vmatpush1.msra.mxu0 0.0
    %937 = vmatprep.subr.mxu0 0.0
    %938 = vmatpush1.msra.mxu0 0.0
    %939 = vmatprep.subr.mxu0 0.0
    %940 = vmatpush1.msra.mxu0 0.0
    %941 = vmatprep.subr.mxu0 0.0
    %942 = vmatpush1.msra.mxu0 0.0
    %943 = vmatprep.subr.mxu0 0.0
    %944 = vmatpush1.msra.mxu0 0.0
    %945 = vmatprep.subr.mxu0 0.0
    %946 = vmatpush1.msra.mxu0 0.0
    %947 = vmatprep.subr.mxu0 0.0
    %948 = vmatpush1.msra.mxu0 0.0
    %949 = vmatprep.subr.mxu0 0.0
    %950 = vmatpush1.msra.mxu0 0.0
    %951 = vmatprep.subr.mxu0 0.0
    %952 = vmatpush1.msra.mxu0 0.0
    %953 = vmatprep.subr.mxu0 0.0
    %954 = vmatpush1.msra.mxu0 0.0
    %955 = vmatprep.subr.mxu0 0.0
    %956 = vmatpush1.msra.mxu0 0.0
    %957 = vmatprep.subr.mxu0 0.0
    %958 = vmatpush1.msra.mxu0 0.0
    %959 = vmatprep.subr.mxu0 0.0
    %960 = vmatpush1.msra.mxu0 0.0
    %961 = vmatprep.subr.mxu0 0.0
    %962 = vmatpush1.msra.mxu0 0.0
    %963 = vmatprep.subr.mxu0 0.0
    %964 = vmatpush1.msra.mxu0 0.0
    %965 = vmatprep.subr.mxu0 0.0
    %966 = vmatpush1.msra.mxu0 0.0
    %967 = vmatprep.subr.mxu0 0.0
    %968 = vmatpush1.msra.mxu0 0.0
    %969 = vmatprep.subr.mxu0 0.0
    %970 = vmatpush1.msra.mxu0 0.0
    %971 = vmatprep.subr.mxu0 0.0
    %972 = vmatpush1.msra.mxu0 0.0
    %973 = vmatprep.subr.mxu0 0.0
    %974 = vmatpush1.msra.mxu0 0.0
    %975 = vmatprep.subr.mxu0 0.0
    %976 = vmatpush1.msra.mxu0 0.0
    %977 = vmatprep.subr.mxu0 0.0
    %978 = vmatpush1.msra.mxu0 0.0
    %979 = vmatprep.mubr.f32.mxu0 0.0
    %980 = vmatmul.mubr.f32.gmra.mrb[0].mxu0 %v913
    %v981 = vpop.f32.mrb[0].mxu0
    %v982 = vadd.f32 0.0, %v981
    %v983 = vpop.f32.mrb[0].mxu0
    %984 = vdwg.mxu0
    %985 = vrot.lane.b32.xlu0 %v152, 112
    %v986 = vpop.permute.xlu0 %985
    %987 = vrot.lane.b32.xlu0 %v238, 112
    %v988 = vpop.permute.xlu0 %987
    %v989 = vsel %vm332, %v986, 0
    %v991 = vsel %vm332, %v988, 0
    %993 = vmatprep.subr.mxu0 0.0
    %994 = vmatpush1.xpose.msra.mxu0 %v991
    %995 = vmatprep.subr.mxu0 0.0
    %996 = vmatpush1.xpose.msra.mxu0 0.0
    %997 = vmatprep.subr.mxu0 0.0
    %998 = vmatpush1.xpose.msra.mxu0 0.0
    %999 = vmatprep.subr.mxu0 0.0
    %1000 = vmatpush1.xpose.msra.mxu0 0.0
    %1001 = vmatprep.subr.mxu0 0.0
    %1002 = vmatpush1.xpose.msra.mxu0 0.0
    %1003 = vmatprep.subr.mxu0 0.0
    %1004 = vmatpush1.xpose.msra.mxu0 0.0
    %1005 = vmatprep.subr.mxu0 0.0
    %1006 = vmatpush1.xpose.msra.mxu0 0.0
    %1007 = vmatprep.subr.mxu0 0.0
    %1008 = vmatpush1.xpose.msra.mxu0 0.0
    %1009 = vmatprep.subr.mxu0 0.0
    %1010 = vmatpush1.xpose.msra.mxu0 0.0
    %1011 = vmatprep.subr.mxu0 0.0
    %1012 = vmatpush1.xpose.msra.mxu0 0.0
    %1013 = vmatprep.subr.mxu0 0.0
    %1014 = vmatpush1.xpose.msra.mxu0 0.0
    %1015 = vmatprep.subr.mxu0 0.0
    %1016 = vmatpush1.xpose.msra.mxu0 0.0
    %1017 = vmatprep.subr.mxu0 0.0
    %1018 = vmatpush1.xpose.msra.mxu0 0.0
    %1019 = vmatprep.subr.mxu0 0.0
    %1020 = vmatpush1.xpose.msra.mxu0 0.0
    %1021 = vmatprep.subr.mxu0 0.0
    %1022 = vmatpush1.xpose.msra.mxu0 0.0
    %1023 = vmatprep.subr.mxu0 0.0
    %1024 = vmatpush1.xpose.msra.mxu0 0.0
    %1025 = vmatprep.subr.mxu0 0.0
    %1026 = vmatpush1.xpose.msra.mxu0 0.0
    %1027 = vmatprep.subr.mxu0 0.0
    %1028 = vmatpush1.xpose.msra.mxu0 0.0
    %1029 = vmatprep.subr.mxu0 0.0
    %1030 = vmatpush1.xpose.msra.mxu0 0.0
    %1031 = vmatprep.subr.mxu0 0.0
    %1032 = vmatpush1.xpose.msra.mxu0 0.0
    %1033 = vmatprep.subr.mxu0 0.0
    %1034 = vmatpush1.xpose.msra.mxu0 0.0
    %1035 = vmatprep.subr.mxu0 0.0
    %1036 = vmatpush1.xpose.msra.mxu0 0.0
    %1037 = vmatprep.subr.mxu0 0.0
    %1038 = vmatpush1.xpose.msra.mxu0 0.0
    %1039 = vmatprep.subr.mxu0 0.0
    %1040 = vmatpush1.xpose.msra.mxu0 0.0
    %1041 = vmatprep.subr.mxu0 0.0
    %1042 = vmatpush1.xpose.msra.mxu0 0.0
    %1043 = vmatprep.subr.mxu0 0.0
    %1044 = vmatpush1.xpose.msra.mxu0 0.0
    %1045 = vmatprep.subr.mxu0 0.0
    %1046 = vmatpush1.xpose.msra.mxu0 0.0
    %1047 = vmatprep.subr.mxu0 0.0
    %1048 = vmatpush1.xpose.msra.mxu0 0.0
    %1049 = vmatprep.subr.mxu0 0.0
    %1050 = vmatpush1.xpose.msra.mxu0 0.0
    %1051 = vmatprep.subr.mxu0 0.0
    %1052 = vmatpush1.xpose.msra.mxu0 0.0
    %1053 = vmatprep.subr.mxu0 0.0
    %1054 = vmatpush1.xpose.msra.mxu0 0.0
    %1055 = vmatprep.subr.mxu0 0.0
    %1056 = vmatpush1.xpose.msra.mxu0 0.0
    %1057 = vmatprep.mubr.f32.mxu0 0.0
    %1058 = vmatmul.mubr.f32.gmra.mrb[0].mxu0 %v989
    %v1059 = vpop.f32.mrb[0].mxu0
    %v1060 = vadd.f32 0.0, %v1059
    %v1061 = vpop.f32.mrb[0].mxu0
    %1062 = vdwg.mxu0
    %1063 = vrot.lane.b32.xlu0 %v157, 112
    %v1064 = vpop.permute.xlu0 %1063
    %1065 = vrot.lane.b32.xlu0 %v243, 112
    %v1066 = vpop.permute.xlu0 %1065
    %v1067 = vsel %vm332, %v1064, 0
    %v1069 = vsel %vm332, %v1066, 0
    %1071 = vmatprep.subr.mxu0 0.0
    %1072 = vmatpush1.xpose.msra.mxu0 %v1069
    %1073 = vmatprep.subr.mxu0 0.0
    %1074 = vmatpush1.xpose.msra.mxu0 0.0
    %1075 = vmatprep.subr.mxu0 0.0
    %1076 = vmatpush1.xpose.msra.mxu0 0.0
    %1077 = vmatprep.subr.mxu0 0.0
    %1078 = vmatpush1.xpose.msra.mxu0 0.0
    %1079 = vmatprep.subr.mxu0 0.0
    %1080 = vmatpush1.xpose.msra.mxu0 0.0
    %1081 = vmatprep.subr.mxu0 0.0
    %1082 = vmatpush1.xpose.msra.mxu0 0.0
    %1083 = vmatprep.subr.mxu0 0.0
    %1084 = vmatpush1.xpose.msra.mxu0 0.0
    %1085 = vmatprep.subr.mxu0 0.0
    %1086 = vmatpush1.xpose.msra.mxu0 0.0
    %1087 = vmatprep.subr.mxu0 0.0
    %1088 = vmatpush1.xpose.msra.mxu0 0.0
    %1089 = vmatprep.subr.mxu0 0.0
    %1090 = vmatpush1.xpose.msra.mxu0 0.0
    %1091 = vmatprep.subr.mxu0 0.0
    %1092 = vmatpush1.xpose.msra.mxu0 0.0
    %1093 = vmatprep.subr.mxu0 0.0
    %1094 = vmatpush1.xpose.msra.mxu0 0.0
    %1095 = vmatprep.subr.mxu0 0.0
    %1096 = vmatpush1.xpose.msra.mxu0 0.0
    %1097 = vmatprep.subr.mxu0 0.0
    %1098 = vmatpush1.xpose.msra.mxu0 0.0
    %1099 = vmatprep.subr.mxu0 0.0
    %1100 = vmatpush1.xpose.msra.mxu0 0.0
    %1101 = vmatprep.subr.mxu0 0.0
    %1102 = vmatpush1.xpose.msra.mxu0 0.0
    %1103 = vmatprep.subr.mxu0 0.0
    %1104 = vmatpush1.xpose.msra.mxu0 0.0
    %1105 = vmatprep.subr.mxu0 0.0
    %1106 = vmatpush1.xpose.msra.mxu0 0.0
    %1107 = vmatprep.subr.mxu0 0.0
    %1108 = vmatpush1.xpose.msra.mxu0 0.0
    %1109 = vmatprep.subr.mxu0 0.0
    %1110 = vmatpush1.xpose.msra.mxu0 0.0
    %1111 = vmatprep.subr.mxu0 0.0
    %1112 = vmatpush1.xpose.msra.mxu0 0.0
    %1113 = vmatprep.subr.mxu0 0.0
    %1114 = vmatpush1.xpose.msra.mxu0 0.0
    %1115 = vmatprep.subr.mxu0 0.0
    %1116 = vmatpush1.xpose.msra.mxu0 0.0
    %1117 = vmatprep.subr.mxu0 0.0
    %1118 = vmatpush1.xpose.msra.mxu0 0.0
    %1119 = vmatprep.subr.mxu0 0.0
    %1120 = vmatpush1.xpose.msra.mxu0 0.0
    %1121 = vmatprep.subr.mxu0 0.0
    %1122 = vmatpush1.xpose.msra.mxu0 0.0
    %1123 = vmatprep.subr.mxu0 0.0
    %1124 = vmatpush1.xpose.msra.mxu0 0.0
    %1125 = vmatprep.subr.mxu0 0.0
    %1126 = vmatpush1.xpose.msra.mxu0 0.0
    %1127 = vmatprep.subr.mxu0 0.0
    %1128 = vmatpush1.xpose.msra.mxu0 0.0
    %1129 = vmatprep.subr.mxu0 0.0
    %1130 = vmatpush1.xpose.msra.mxu0 0.0
    %1131 = vmatprep.subr.mxu0 0.0
    %1132 = vmatpush1.xpose.msra.mxu0 0.0
    %1133 = vmatprep.subr.mxu0 0.0
    %1134 = vmatpush1.xpose.msra.mxu0 0.0
    %1135 = vmatprep.mubr.f32.mxu0 0.0
    %1136 = vmatmul.mubr.f32.gmra.mrb[0].mxu0 %v1067
    %v1137 = vpop.f32.mrb[0].mxu0
    %v1138 = vadd.f32 0.0, %v1137
    %v1139 = vpop.f32.mrb[0].mxu0
    %1140 = vdwg.mxu0
    %v1141 = vsel %vm332, %v1060, -inf
    %1142 = vmax.xlane.f32.xlu0 %v1141
    %v1143 = vpop.xlane.xlu0 %1142
    %v1144 = vsel %vm332, %v1138, -inf
    %1145 = vmax.xlane.f32.xlu0 %v1144
    %v1146 = vpop.xlane.xlu0 %1145
    %v1147 = vsub.f32 %v1060, %v1143
    %v1148 = vsub.f32 %v1138, %v1146
    %v1149 = vmul.f32 %v1147, 1.442695
    %v1150 = vpow.pop %v1149
    %v1151 = vmul.f32 %v1148, 1.442695
    %v1152 = vpow.pop %v1151
    %v1153 = vsel %vm332, %v1150, 0.0
    %1154 = vadd.xlane.f32.xlu0 %v1153
    %v1155 = vpop.xlane.xlu0 %1154
    %v1156 = vsel %vm332, %v1152, 0.0
    %1157 = vadd.xlane.f32.xlu0 %v1156
    %v1158 = vpop.xlane.xlu0 %1157
    %v1159 = vrcp.pop %v1155
    %v1160 = vrcp.pop %v1158
    %v1161 = vmul.f32 %v1150, %v1159
    %v1162 = vmul.f32 %v1152, %v1160
    %1163 = vrot.lane.b32.xlu0 %v324, 112
    %v1164 = vpop.permute.xlu0 %1163
    %v1167 = vsel %vm332, %v1161, 0
    %1169 = vmatprep.subr.mxu0 0.0
    %1170 = vmatpush1.msra.mxu0 %v1164
    %1171 = vmatprep.subr.mxu0 0.0
    %1172 = vmatpush1.msra.mxu0 0.0
    %1173 = vmatprep.subr.mxu0 0.0
    %1174 = vmatpush1.msra.mxu0 0.0
    %1175 = vmatprep.subr.mxu0 0.0
    %1176 = vmatpush1.msra.mxu0 0.0
    %1177 = vmatprep.subr.mxu0 0.0
    %1178 = vmatpush1.msra.mxu0 0.0
    %1179 = vmatprep.subr.mxu0 0.0
    %1180 = vmatpush1.msra.mxu0 0.0
    %1181 = vmatprep.subr.mxu0 0.0
    %1182 = vmatpush1.msra.mxu0 0.0
    %1183 = vmatprep.subr.mxu0 0.0
    %1184 = vmatpush1.msra.mxu0 0.0
    %1185 = vmatprep.subr.mxu0 0.0
    %1186 = vmatpush1.msra.mxu0 0.0
    %1187 = vmatprep.subr.mxu0 0.0
    %1188 = vmatpush1.msra.mxu0 0.0
    %1189 = vmatprep.subr.mxu0 0.0
    %1190 = vmatpush1.msra.mxu0 0.0
    %1191 = vmatprep.subr.mxu0 0.0
    %1192 = vmatpush1.msra.mxu0 0.0
    %1193 = vmatprep.subr.mxu0 0.0
    %1194 = vmatpush1.msra.mxu0 0.0
    %1195 = vmatprep.subr.mxu0 0.0
    %1196 = vmatpush1.msra.mxu0 0.0
    %1197 = vmatprep.subr.mxu0 0.0
    %1198 = vmatpush1.msra.mxu0 0.0
    %1199 = vmatprep.subr.mxu0 0.0
    %1200 = vmatpush1.msra.mxu0 0.0
    %1201 = vmatprep.subr.mxu0 0.0
    %1202 = vmatpush1.msra.mxu0 0.0
    %1203 = vmatprep.subr.mxu0 0.0
    %1204 = vmatpush1.msra.mxu0 0.0
    %1205 = vmatprep.subr.mxu0 0.0
    %1206 = vmatpush1.msra.mxu0 0.0
    %1207 = vmatprep.subr.mxu0 0.0
    %1208 = vmatpush1.msra.mxu0 0.0
    %1209 = vmatprep.subr.mxu0 0.0
    %1210 = vmatpush1.msra.mxu0 0.0
    %1211 = vmatprep.subr.mxu0 0.0
    %1212 = vmatpush1.msra.mxu0 0.0
    %1213 = vmatprep.subr.mxu0 0.0
    %1214 = vmatpush1.msra.mxu0 0.0
    %1215 = vmatprep.subr.mxu0 0.0
    %1216 = vmatpush1.msra.mxu0 0.0
    %1217 = vmatprep.subr.mxu0 0.0
    %1218 = vmatpush1.msra.mxu0 0.0
    %1219 = vmatprep.subr.mxu0 0.0
    %1220 = vmatpush1.msra.mxu0 0.0
    %1221 = vmatprep.subr.mxu0 0.0
    %1222 = vmatpush1.msra.mxu0 0.0
    %1223 = vmatprep.subr.mxu0 0.0
    %1224 = vmatpush1.msra.mxu0 0.0
    %1225 = vmatprep.subr.mxu0 0.0
    %1226 = vmatpush1.msra.mxu0 0.0
    %1227 = vmatprep.subr.mxu0 0.0
    %1228 = vmatpush1.msra.mxu0 0.0
    %1229 = vmatprep.subr.mxu0 0.0
    %1230 = vmatpush1.msra.mxu0 0.0
    %1231 = vmatprep.subr.mxu0 0.0
    %1232 = vmatpush1.msra.mxu0 0.0
    %1233 = vmatprep.mubr.f32.mxu0 0.0
    %1234 = vmatmul.mubr.f32.gmra.mrb[0].mxu0 %v1167
    %v1235 = vpop.f32.mrb[0].mxu0
    %v1236 = vadd.f32 0.0, %v1235
    %v1237 = vpop.f32.mrb[0].mxu0
    %1238 = vdwg.mxu0
    %1239 = vrot.lane.b32.xlu0 %v329, 112
    %v1240 = vpop.permute.xlu0 %1239
    %v1243 = vsel %vm332, %v1162, 0
    %1245 = vmatprep.subr.mxu0 0.0
    %1246 = vmatpush1.msra.mxu0 %v1240
    %1247 = vmatprep.subr.mxu0 0.0
    %1248 = vmatpush1.msra.mxu0 0.0
    %1249 = vmatprep.subr.mxu0 0.0
    %1250 = vmatpush1.msra.mxu0 0.0
    %1251 = vmatprep.subr.mxu0 0.0
    %1252 = vmatpush1.msra.mxu0 0.0
    %1253 = vmatprep.subr.mxu0 0.0
    %1254 = vmatpush1.msra.mxu0 0.0
    %1255 = vmatprep.subr.mxu0 0.0
    %1256 = vmatpush1.msra.mxu0 0.0
    %1257 = vmatprep.subr.mxu0 0.0
    %1258 = vmatpush1.msra.mxu0 0.0
    %1259 = vmatprep.subr.mxu0 0.0
    %1260 = vmatpush1.msra.mxu0 0.0
    %1261 = vmatprep.subr.mxu0 0.0
    %1262 = vmatpush1.msra.mxu0 0.0
    %1263 = vmatprep.subr.mxu0 0.0
    %1264 = vmatpush1.msra.mxu0 0.0
    %1265 = vmatprep.subr.mxu0 0.0
    %1266 = vmatpush1.msra.mxu0 0.0
    %1267 = vmatprep.subr.mxu0 0.0
    %1268 = vmatpush1.msra.mxu0 0.0
    %1269 = vmatprep.subr.mxu0 0.0
    %1270 = vmatpush1.msra.mxu0 0.0
    %1271 = vmatprep.subr.mxu0 0.0
    %1272 = vmatpush1.msra.mxu0 0.0
    %1273 = vmatprep.subr.mxu0 0.0
    %1274 = vmatpush1.msra.mxu0 0.0
    %1275 = vmatprep.subr.mxu0 0.0
    %1276 = vmatpush1.msra.mxu0 0.0
    %1277 = vmatprep.subr.mxu0 0.0
    %1278 = vmatpush1.msra.mxu0 0.0
    %1279 = vmatprep.subr.mxu0 0.0
    %1280 = vmatpush1.msra.mxu0 0.0
    %1281 = vmatprep.subr.mxu0 0.0
    %1282 = vmatpush1.msra.mxu0 0.0
    %1283 = vmatprep.subr.mxu0 0.0
    %1284 = vmatpush1.msra.mxu0 0.0
    %1285 = vmatprep.subr.mxu0 0.0
    %1286 = vmatpush1.msra.mxu0 0.0
    %1287 = vmatprep.subr.mxu0 0.0
    %1288 = vmatpush1.msra.mxu0 0.0
    %1289 = vmatprep.subr.mxu0 0.0
    %1290 = vmatpush1.msra.mxu0 0.0
    %1291 = vmatprep.subr.mxu0 0.0
    %1292 = vmatpush1.msra.mxu0 0.0
    %1293 = vmatprep.subr.mxu0 0.0
    %1294 = vmatpush1.msra.mxu0 0.0
    %1295 = vmatprep.subr.mxu0 0.0
    %1296 = vmatpush1.msra.mxu0 0.0
    %1297 = vmatprep.subr.mxu0 0.0
    %1298 = vmatpush1.msra.mxu0 0.0
    %1299 = vmatprep.subr.mxu0 0.0
    %1300 = vmatpush1.msra.mxu0 0.0
    %1301 = vmatprep.subr.mxu0 0.0
    %1302 = vmatpush1.msra.mxu0 0.0
    %1303 = vmatprep.subr.mxu0 0.0
    %1304 = vmatpush1.msra.mxu0 0.0
    %1305 = vmatprep.subr.mxu0 0.0
    %1306 = vmatpush1.msra.mxu0 0.0
    %1307 = vmatprep.subr.mxu0 0.0
    %1308 = vmatpush1.msra.mxu0 0.0
    %1309 = vmatprep.mubr.f32.mxu0 0.0
    %1310 = vmatmul.mubr.f32.gmra.mrb[0].mxu0 %v1243
    %v1311 = vpop.f32.mrb[0].mxu0
    %v1312 = vadd.f32 0.0, %v1311
    %v1313 = vpop.f32.mrb[0].mxu0
    %1314 = vdwg.mxu0
    %1315 = vrot.lane.b32.xlu0 %v152, 104
    %v1316 = vpop.permute.xlu0 %1315
    %1317 = vrot.lane.b32.xlu0 %v238, 104
    %v1318 = vpop.permute.xlu0 %1317
    %v1319 = vsel %vm332, %v1316, 0
    %v1321 = vsel %vm332, %v1318, 0
    %1323 = vmatprep.subr.mxu0 0.0
    %1324 = vmatpush1.xpose.msra.mxu0 %v1321
    %1325 = vmatprep.subr.mxu0 0.0
    %1326 = vmatpush1.xpose.msra.mxu0 0.0
    %1327 = vmatprep.subr.mxu0 0.0
    %1328 = vmatpush1.xpose.msra.mxu0 0.0
    %1329 = vmatprep.subr.mxu0 0.0
    %1330 = vmatpush1.xpose.msra.mxu0 0.0
    %1331 = vmatprep.subr.mxu0 0.0
    %1332 = vmatpush1.xpose.msra.mxu0 0.0
    %1333 = vmatprep.subr.mxu0 0.0
    %1334 = vmatpush1.xpose.msra.mxu0 0.0
    %1335 = vmatprep.subr.mxu0 0.0
    %1336 = vmatpush1.xpose.msra.mxu0 0.0
    %1337 = vmatprep.subr.mxu0 0.0
    %1338 = vmatpush1.xpose.msra.mxu0 0.0
    %1339 = vmatprep.subr.mxu0 0.0
    %1340 = vmatpush1.xpose.msra.mxu0 0.0
    %1341 = vmatprep.subr.mxu0 0.0
    %1342 = vmatpush1.xpose.msra.mxu0 0.0
    %1343 = vmatprep.subr.mxu0 0.0
    %1344 = vmatpush1.xpose.msra.mxu0 0.0
    %1345 = vmatprep.subr.mxu0 0.0
    %1346 = vmatpush1.xpose.msra.mxu0 0.0
    %1347 = vmatprep.subr.mxu0 0.0
    %1348 = vmatpush1.xpose.msra.mxu0 0.0
    %1349 = vmatprep.subr.mxu0 0.0
    %1350 = vmatpush1.xpose.msra.mxu0 0.0
    %1351 = vmatprep.subr.mxu0 0.0
    %1352 = vmatpush1.xpose.msra.mxu0 0.0
    %1353 = vmatprep.subr.mxu0 0.0
    %1354 = vmatpush1.xpose.msra.mxu0 0.0
    %1355 = vmatprep.subr.mxu0 0.0
    %1356 = vmatpush1.xpose.msra.mxu0 0.0
    %1357 = vmatprep.subr.mxu0 0.0
    %1358 = vmatpush1.xpose.msra.mxu0 0.0
    %1359 = vmatprep.subr.mxu0 0.0
    %1360 = vmatpush1.xpose.msra.mxu0 0.0
    %1361 = vmatprep.subr.mxu0 0.0
    %1362 = vmatpush1.xpose.msra.mxu0 0.0
    %1363 = vmatprep.subr.mxu0 0.0
    %1364 = vmatpush1.xpose.msra.mxu0 0.0
    %1365 = vmatprep.subr.mxu0 0.0
    %1366 = vmatpush1.xpose.msra.mxu0 0.0
    %1367 = vmatprep.subr.mxu0 0.0
    %1368 = vmatpush1.xpose.msra.mxu0 0.0
    %1369 = vmatprep.subr.mxu0 0.0
    %1370 = vmatpush1.xpose.msra.mxu0 0.0
    %1371 = vmatprep.subr.mxu0 0.0
    %1372 = vmatpush1.xpose.msra.mxu0 0.0
    %1373 = vmatprep.subr.mxu0 0.0
    %1374 = vmatpush1.xpose.msra.mxu0 0.0
    %1375 = vmatprep.subr.mxu0 0.0
    %1376 = vmatpush1.xpose.msra.mxu0 0.0
    %1377 = vmatprep.subr.mxu0 0.0
    %1378 = vmatpush1.xpose.msra.mxu0 0.0
    %1379 = vmatprep.subr.mxu0 0.0
    %1380 = vmatpush1.xpose.msra.mxu0 0.0
    %1381 = vmatprep.subr.mxu0 0.0
    %1382 = vmatpush1.xpose.msra.mxu0 0.0
    %1383 = vmatprep.subr.mxu0 0.0
    %1384 = vmatpush1.xpose.msra.mxu0 0.0
    %1385 = vmatprep.subr.mxu0 0.0
    %1386 = vmatpush1.xpose.msra.mxu0 0.0
    %1387 = vmatprep.mubr.f32.mxu0 0.0
    %1388 = vmatmul.mubr.f32.gmra.mrb[0].mxu0 %v1319
    %v1389 = vpop.f32.mrb[0].mxu0
    %v1390 = vadd.f32 0.0, %v1389
    %v1391 = vpop.f32.mrb[0].mxu0
    %1392 = vdwg.mxu0
    %1393 = vrot.lane.b32.xlu0 %v157, 104
    %v1394 = vpop.permute.xlu0 %1393
    %1395 = vrot.lane.b32.xlu0 %v243, 104
    %v1396 = vpop.permute.xlu0 %1395
    %v1397 = vsel %vm332, %v1394, 0
    %v1399 = vsel %vm332, %v1396, 0
    %1401 = vmatprep.subr.mxu0 0.0
    %1402 = vmatpush1.xpose.msra.mxu0 %v1399
    %1403 = vmatprep.subr.mxu0 0.0
    %1404 = vmatpush1.xpose.msra.mxu0 0.0
    %1405 = vmatprep.subr.mxu0 0.0
    %1406 = vmatpush1.xpose.msra.mxu0 0.0
    %1407 = vmatprep.subr.mxu0 0.0
    %1408 = vmatpush1.xpose.msra.mxu0 0.0
    %1409 = vmatprep.subr.mxu0 0.0
    %1410 = vmatpush1.xpose.msra.mxu0 0.0
    %1411 = vmatprep.subr.mxu0 0.0
    %1412 = vmatpush1.xpose.msra.mxu0 0.0
    %1413 = vmatprep.subr.mxu0 0.0
    %1414 = vmatpush1.xpose.msra.mxu0 0.0
    %1415 = vmatprep.subr.mxu0 0.0
    %1416 = vmatpush1.xpose.msra.mxu0 0.0
    %1417 = vmatprep.subr.mxu0 0.0
    %1418 = vmatpush1.xpose.msra.mxu0 0.0
    %1419 = vmatprep.subr.mxu0 0.0
    %1420 = vmatpush1.xpose.msra.mxu0 0.0
    %1421 = vmatprep.subr.mxu0 0.0
    %1422 = vmatpush1.xpose.msra.mxu0 0.0
    %1423 = vmatprep.subr.mxu0 0.0
    %1424 = vmatpush1.xpose.msra.mxu0 0.0
    %1425 = vmatprep.subr.mxu0 0.0
    %1426 = vmatpush1.xpose.msra.mxu0 0.0
    %1427 = vmatprep.subr.mxu0 0.0
    %1428 = vmatpush1.xpose.msra.mxu0 0.0
    %1429 = vmatprep.subr.mxu0 0.0
    %1430 = vmatpush1.xpose.msra.mxu0 0.0
    %1431 = vmatprep.subr.mxu0 0.0
    %1432 = vmatpush1.xpose.msra.mxu0 0.0
    %1433 = vmatprep.subr.mxu0 0.0
    %1434 = vmatpush1.xpose.msra.mxu0 0.0
    %1435 = vmatprep.subr.mxu0 0.0
    %1436 = vmatpush1.xpose.msra.mxu0 0.0
    %1437 = vmatprep.subr.mxu0 0.0
    %1438 = vmatpush1.xpose.msra.mxu0 0.0
    %1439 = vmatprep.subr.mxu0 0.0
    %1440 = vmatpush1.xpose.msra.mxu0 0.0
    %1441 = vmatprep.subr.mxu0 0.0
    %1442 = vmatpush1.xpose.msra.mxu0 0.0
    %1443 = vmatprep.subr.mxu0 0.0
    %1444 = vmatpush1.xpose.msra.mxu0 0.0
    %1445 = vmatprep.subr.mxu0 0.0
    %1446 = vmatpush1.xpose.msra.mxu0 0.0
    %1447 = vmatprep.subr.mxu0 0.0
    %1448 = vmatpush1.xpose.msra.mxu0 0.0
    %1449 = vmatprep.subr.mxu0 0.0
    %1450 = vmatpush1.xpose.msra.mxu0 0.0
    %1451 = vmatprep.subr.mxu0 0.0
    %1452 = vmatpush1.xpose.msra.mxu0 0.0
    %1453 = vmatprep.subr.mxu0 0.0
    %1454 = vmatpush1.xpose.msra.mxu0 0.0
    %1455 = vmatprep.subr.mxu0 0.0
    %1456 = vmatpush1.xpose.msra.mxu0 0.0
    %1457 = vmatprep.subr.mxu0 0.0
    %1458 = vmatpush1.xpose.msra.mxu0 0.0
    %1459 = vmatprep.subr.mxu0 0.0
    %1460 = vmatpush1.xpose.msra.mxu0 0.0
    %1461 = vmatprep.subr.mxu0 0.0
    %1462 = vmatpush1.xpose.msra.mxu0 0.0
    %1463 = vmatprep.subr.mxu0 0.0
    %1464 = vmatpush1.xpose.msra.mxu0 0.0
    %1465 = vmatprep.mubr.f32.mxu0 0.0
    %1466 = vmatmul.mubr.f32.gmra.mrb[0].mxu0 %v1397
    %v1467 = vpop.f32.mrb[0].mxu0
    %v1468 = vadd.f32 0.0, %v1467
    %v1469 = vpop.f32.mrb[0].mxu0
    %1470 = vdwg.mxu0
    %v1471 = vsel %vm332, %v1390, -inf
    %1472 = vmax.xlane.f32.xlu0 %v1471
    %v1473 = vpop.xlane.xlu0 %1472
    %v1474 = vsel %vm332, %v1468, -inf
    %1475 = vmax.xlane.f32.xlu0 %v1474
    %v1476 = vpop.xlane.xlu0 %1475
    %v1477 = vsub.f32 %v1390, %v1473
    %v1478 = vsub.f32 %v1468, %v1476
    %v1479 = vmul.f32 %v1477, 1.442695
    %v1480 = vpow.pop %v1479
    %v1481 = vmul.f32 %v1478, 1.442695
    %v1482 = vpow.pop %v1481
    %v1483 = vsel %vm332, %v1480, 0.0
    %1484 = vadd.xlane.f32.xlu0 %v1483
    %v1485 = vpop.xlane.xlu0 %1484
    %v1486 = vsel %vm332, %v1482, 0.0
    %1487 = vadd.xlane.f32.xlu0 %v1486
    %v1488 = vpop.xlane.xlu0 %1487
    %v1489 = vrcp.pop %v1485
    %v1490 = vrcp.pop %v1488
    %v1491 = vmul.f32 %v1480, %v1489
    %v1492 = vmul.f32 %v1482, %v1490
    %1493 = vrot.lane.b32.xlu0 %v324, 104
    %v1494 = vpop.permute.xlu0 %1493
    %v1497 = vsel %vm332, %v1491, 0
    %1499 = vmatprep.subr.mxu0 0.0
    %1500 = vmatpush1.msra.mxu0 %v1494
    %1501 = vmatprep.subr.mxu0 0.0
    %1502 = vmatpush1.msra.mxu0 0.0
    %1503 = vmatprep.subr.mxu0 0.0
    %1504 = vmatpush1.msra.mxu0 0.0
    %1505 = vmatprep.subr.mxu0 0.0
    %1506 = vmatpush1.msra.mxu0 0.0
    %1507 = vmatprep.subr.mxu0 0.0
    %1508 = vmatpush1.msra.mxu0 0.0
    %1509 = vmatprep.subr.mxu0 0.0
    %1510 = vmatpush1.msra.mxu0 0.0
    %1511 = vmatprep.subr.mxu0 0.0
    %1512 = vmatpush1.msra.mxu0 0.0
    %1513 = vmatprep.subr.mxu0 0.0
    %1514 = vmatpush1.msra.mxu0 0.0
    %1515 = vmatprep.subr.mxu0 0.0
    %1516 = vmatpush1.msra.mxu0 0.0
    %1517 = vmatprep.subr.mxu0 0.0
    %1518 = vmatpush1.msra.mxu0 0.0
    %1519 = vmatprep.subr.mxu0 0.0
    %1520 = vmatpush1.msra.mxu0 0.0
    %1521 = vmatprep.subr.mxu0 0.0
    %1522 = vmatpush1.msra.mxu0 0.0
    %1523 = vmatprep.subr.mxu0 0.0
    %1524 = vmatpush1.msra.mxu0 0.0
    %1525 = vmatprep.subr.mxu0 0.0
    %1526 = vmatpush1.msra.mxu0 0.0
    %1527 = vmatprep.subr.mxu0 0.0
    %1528 = vmatpush1.msra.mxu0 0.0
    %1529 = vmatprep.subr.mxu0 0.0
    %1530 = vmatpush1.msra.mxu0 0.0
    %1531 = vmatprep.subr.mxu0 0.0
    %1532 = vmatpush1.msra.mxu0 0.0
    %1533 = vmatprep.subr.mxu0 0.0
    %1534 = vmatpush1.msra.mxu0 0.0
    %1535 = vmatprep.subr.mxu0 0.0
    %1536 = vmatpush1.msra.mxu0 0.0
    %1537 = vmatprep.subr.mxu0 0.0
    %1538 = vmatpush1.msra.mxu0 0.0
    %1539 = vmatprep.subr.mxu0 0.0
    %1540 = vmatpush1.msra.mxu0 0.0
    %1541 = vmatprep.subr.mxu0 0.0
    %1542 = vmatpush1.msra.mxu0 0.0
    %1543 = vmatprep.subr.mxu0 0.0
    %1544 = vmatpush1.msra.mxu0 0.0
    %1545 = vmatprep.subr.mxu0 0.0
    %1546 = vmatpush1.msra.mxu0 0.0
    %1547 = vmatprep.subr.mxu0 0.0
    %1548 = vmatpush1.msra.mxu0 0.0
    %1549 = vmatprep.subr.mxu0 0.0
    %1550 = vmatpush1.msra.mxu0 0.0
    %1551 = vmatprep.subr.mxu0 0.0
    %1552 = vmatpush1.msra.mxu0 0.0
    %1553 = vmatprep.subr.mxu0 0.0
    %1554 = vmatpush1.msra.mxu0 0.0
    %1555 = vmatprep.subr.mxu0 0.0
    %1556 = vmatpush1.msra.mxu0 0.0
    %1557 = vmatprep.subr.mxu0 0.0
    %1558 = vmatpush1.msra.mxu0 0.0
    %1559 = vmatprep.subr.mxu0 0.0
    %1560 = vmatpush1.msra.mxu0 0.0
    %1561 = vmatprep.subr.mxu0 0.0
    %1562 = vmatpush1.msra.mxu0 0.0
    %1563 = vmatprep.mubr.f32.mxu0 0.0
    %1564 = vmatmul.mubr.f32.gmra.mrb[0].mxu0 %v1497
    %v1565 = vpop.f32.mrb[0].mxu0
    %v1566 = vadd.f32 0.0, %v1565
    %v1567 = vpop.f32.mrb[0].mxu0
    %1568 = vdwg.mxu0
    %1569 = vrot.lane.b32.xlu0 %v329, 104
    %v1570 = vpop.permute.xlu0 %1569
    %v1573 = vsel %vm332, %v1492, 0
    %1575 = vmatprep.subr.mxu0 0.0
    %1576 = vmatpush1.msra.mxu0 %v1570
    %1577 = vmatprep.subr.mxu0 0.0
    %1578 = vmatpush1.msra.mxu0 0.0
    %1579 = vmatprep.subr.mxu0 0.0
    %1580 = vmatpush1.msra.mxu0 0.0
    %1581 = vmatprep.subr.mxu0 0.0
    %1582 = vmatpush1.msra.mxu0 0.0
    %1583 = vmatprep.subr.mxu0 0.0
    %1584 = vmatpush1.msra.mxu0 0.0
    %1585 = vmatprep.subr.mxu0 0.0
    %1586 = vmatpush1.msra.mxu0 0.0
    %1587 = vmatprep.subr.mxu0 0.0
    %1588 = vmatpush1.msra.mxu0 0.0
    %1589 = vmatprep.subr.mxu0 0.0
    %1590 = vmatpush1.msra.mxu0 0.0
    %1591 = vmatprep.subr.mxu0 0.0
    %1592 = vmatpush1.msra.mxu0 0.0
    %1593 = vmatprep.subr.mxu0 0.0
    %1594 = vmatpush1.msra.mxu0 0.0
    %1595 = vmatprep.subr.mxu0 0.0
    %1596 = vmatpush1.msra.mxu0 0.0
    %1597 = vmatprep.subr.mxu0 0.0
    %1598 = vmatpush1.msra.mxu0 0.0
    %1599 = vmatprep.subr.mxu0 0.0
    %1600 = vmatpush1.msra.mxu0 0.0
    %1601 = vmatprep.subr.mxu0 0.0
    %1602 = vmatpush1.msra.mxu0 0.0
    %1603 = vmatprep.subr.mxu0 0.0
    %1604 = vmatpush1.msra.mxu0 0.0
    %1605 = vmatprep.subr.mxu0 0.0
    %1606 = vmatpush1.msra.mxu0 0.0
    %1607 = vmatprep.subr.mxu0 0.0
    %1608 = vmatpush1.msra.mxu0 0.0
    %1609 = vmatprep.subr.mxu0 0.0
    %1610 = vmatpush1.msra.mxu0 0.0
    %1611 = vmatprep.subr.mxu0 0.0
    %1612 = vmatpush1.msra.mxu0 0.0
    %1613 = vmatprep.subr.mxu0 0.0
    %1614 = vmatpush1.msra.mxu0 0.0
    %1615 = vmatprep.subr.mxu0 0.0
    %1616 = vmatpush1.msra.mxu0 0.0
    %1617 = vmatprep.subr.mxu0 0.0
    %1618 = vmatpush1.msra.mxu0 0.0
    %1619 = vmatprep.subr.mxu0 0.0
    %1620 = vmatpush1.msra.mxu0 0.0
    %1621 = vmatprep.subr.mxu0 0.0
    %1622 = vmatpush1.msra.mxu0 0.0
    %1623 = vmatprep.subr.mxu0 0.0
    %1624 = vmatpush1.msra.mxu0 0.0
    %1625 = vmatprep.subr.mxu0 0.0
    %1626 = vmatpush1.msra.mxu0 0.0
    %1627 = vmatprep.subr.mxu0 0.0
    %1628 = vmatpush1.msra.mxu0 0.0
    %1629 = vmatprep.subr.mxu0 0.0
    %1630 = vmatpush1.msra.mxu0 0.0
    %1631 = vmatprep.subr.mxu0 0.0
    %1632 = vmatpush1.msra.mxu0 0.0
    %1633 = vmatprep.subr.mxu0 0.0
    %1634 = vmatpush1.msra.mxu0 0.0
    %1635 = vmatprep.subr.mxu0 0.0
    %1636 = vmatpush1.msra.mxu0 0.0
    %1637 = vmatprep.subr.mxu0 0.0
    %1638 = vmatpush1.msra.mxu0 0.0
    %1639 = vmatprep.mubr.f32.mxu0 0.0
    %1640 = vmatmul.mubr.f32.gmra.mrb[0].mxu0 %v1573
    %v1641 = vpop.f32.mrb[0].mxu0
    %v1642 = vadd.f32 0.0, %v1641
    %v1643 = vpop.f32.mrb[0].mxu0
    %1644 = vdwg.mxu0
    %v1647 = vrot.slane %v577, 1
    %v1648 = vrot.slane %v650, 1
    %1649 = vrot.lane.b32.xlu0 %v1647, 8
    %v1650 = vpop.permute.xlu0 %1649
    %1651 = vrot.lane.b32.xlu0 %v1648, 8
    %v1652 = vpop.permute.xlu0 %1651
    %v1655 = vrot.slane %v577, 2
    %v1656 = vrot.slane %v650, 2
    %1657 = vrot.lane.b32.xlu0 %v1655, 16
    %v1658 = vpop.permute.xlu0 %1657
    %1659 = vrot.lane.b32.xlu0 %v1656, 16
    %v1660 = vpop.permute.xlu0 %1659
    %v1663 = vrot.slane %v577, 3
    %v1664 = vrot.slane %v650, 3
    %1665 = vrot.lane.b32.xlu0 %v1663, 24
    %v1666 = vpop.permute.xlu0 %1665
    %1667 = vrot.lane.b32.xlu0 %v1664, 24
    %v1668 = vpop.permute.xlu0 %1667
    %v1671 = vsel %vm332, %v577, %v1650
    %v1672 = vsel %vm332, %v650, %v1652
    %vm1673 = vcmask 130048
    %v1674 = vsel %vm1673, %v1671, %v1658
    %v1675 = vsel %vm1673, %v1672, %v1660
    %vm1676 = vcmask 195584
    %v1677 = vsel %vm1676, %v1674, %v1666
    %v1678 = vsel %vm1676, %v1675, %v1668
    %v1681 = vrot.slane %v905, 1
    %v1682 = vrot.slane %v982, 1
    %1683 = vrot.lane.b32.xlu0 %v1681, 8
    %v1684 = vpop.permute.xlu0 %1683
    %1685 = vrot.lane.b32.xlu0 %v1682, 8
    %v1686 = vpop.permute.xlu0 %1685
    %v1689 = vrot.slane %v905, 2
    %v1690 = vrot.slane %v982, 2
    %1691 = vrot.lane.b32.xlu0 %v1689, 16
    %v1692 = vpop.permute.xlu0 %1691
    %1693 = vrot.lane.b32.xlu0 %v1690, 16
    %v1694 = vpop.permute.xlu0 %1693
    %v1697 = vrot.slane %v905, 3
    %v1698 = vrot.slane %v982, 3
    %1699 = vrot.lane.b32.xlu0 %v1697, 24
    %v1700 = vpop.permute.xlu0 %1699
    %1701 = vrot.lane.b32.xlu0 %v1698, 24
    %v1702 = vpop.permute.xlu0 %1701
    %v1705 = vsel %vm332, %v905, %v1684
    %v1706 = vsel %vm332, %v982, %v1686
    %v1707 = vsel %vm1673, %v1705, %v1692
    %v1708 = vsel %vm1673, %v1706, %v1694
    %v1709 = vsel %vm1676, %v1707, %v1700
    %v1710 = vsel %vm1676, %v1708, %v1702
    %v1713 = vrot.slane %v1236, 1
    %v1714 = vrot.slane %v1312, 1
    %1715 = vrot.lane.b32.xlu0 %v1713, 8
    %v1716 = vpop.permute.xlu0 %1715
    %1717 = vrot.lane.b32.xlu0 %v1714, 8
    %v1718 = vpop.permute.xlu0 %1717
    %v1721 = vrot.slane %v1236, 2
    %v1722 = vrot.slane %v1312, 2
    %1723 = vrot.lane.b32.xlu0 %v1721, 16
    %v1724 = vpop.permute.xlu0 %1723
    %1725 = vrot.lane.b32.xlu0 %v1722, 16
    %v1726 = vpop.permute.xlu0 %1725
    %v1729 = vrot.slane %v1236, 3
    %v1730 = vrot.slane %v1312, 3
    %1731 = vrot.lane.b32.xlu0 %v1729, 24
    %v1732 = vpop.permute.xlu0 %1731
    %1733 = vrot.lane.b32.xlu0 %v1730, 24
    %v1734 = vpop.permute.xlu0 %1733
    %v1737 = vsel %vm332, %v1236, %v1716
    %v1738 = vsel %vm332, %v1312, %v1718
    %v1739 = vsel %vm1673, %v1737, %v1724
    %v1740 = vsel %vm1673, %v1738, %v1726
    %v1741 = vsel %vm1676, %v1739, %v1732
    %v1742 = vsel %vm1676, %v1740, %v1734
    %v1745 = vrot.slane %v1566, 1
    %v1746 = vrot.slane %v1642, 1
    %1747 = vrot.lane.b32.xlu0 %v1745, 8
    %v1748 = vpop.permute.xlu0 %1747
    %1749 = vrot.lane.b32.xlu0 %v1746, 8
    %v1750 = vpop.permute.xlu0 %1749
    %v1753 = vrot.slane %v1566, 2
    %v1754 = vrot.slane %v1642, 2
    %1755 = vrot.lane.b32.xlu0 %v1753, 16
    %v1756 = vpop.permute.xlu0 %1755
    %1757 = vrot.lane.b32.xlu0 %v1754, 16
    %v1758 = vpop.permute.xlu0 %1757
    %v1761 = vrot.slane %v1566, 3
    %v1762 = vrot.slane %v1642, 3
    %1763 = vrot.lane.b32.xlu0 %v1761, 24
    %v1764 = vpop.permute.xlu0 %1763
    %1765 = vrot.lane.b32.xlu0 %v1762, 24
    %v1766 = vpop.permute.xlu0 %1765
    %v1769 = vsel %vm332, %v1566, %v1748
    %v1770 = vsel %vm332, %v1642, %v1750
    %v1771 = vsel %vm1673, %v1769, %v1756
    %v1772 = vsel %vm1673, %v1770, %v1758
    %v1773 = vsel %vm1676, %v1771, %v1764
    %v1774 = vsel %vm1676, %v1772, %v1766
    %v1777 = vrot.slane %v1677, 3
    %v1778 = vrot.slane %v1678, 3
    %v1783 = vrot.slane %v1709, 6
    %v1784 = vrot.slane %v1710, 6
    %v1787 = vrot.slane %v1709, 1
    %v1788 = vrot.slane %v1710, 1
    %v1793 = vrot.slane %v1741, 4
    %v1794 = vrot.slane %v1742, 4
    %v1797 = vrot.slane %v1741, 7
    %v1798 = vrot.slane %v1742, 7
    %v1803 = vrot.slane %v1773, 2
    %v1804 = vrot.slane %v1774, 2
    %v1807 = vrot.slane %v1773, 5
    %v1808 = vrot.slane %v1774, 5
    %vm1811 = vcmask 1040384
    %v1812 = vsel %vm1811, %v1677, %v1777
    %v1813 = vsel %vm1811, %v1678, %v1778
    %vm1814 = vcmask 1041408
    %v1815 = vsel %vm1814, %v1812, %v1783
    %v1816 = vsel %vm1814, %v1813, %v1784
    %vm1817 = vcmask 1042432
    %v1818 = vsel %vm1817, %v1815, %v1787
    %v1819 = vsel %vm1817, %v1816, %v1788
    %vm1820 = vcmask 1043456
    %v1821 = vsel %vm1820, %v1818, %v1793
    %v1822 = vsel %vm1820, %v1819, %v1794
    %vm1823 = vcmask 1044480
    %v1824 = vsel %vm1823, %v1821, %v1797
    %v1825 = vsel %vm1823, %v1822, %v1798
    %vm1826 = vcmask 1045504
    %v1827 = vsel %vm1826, %v1824, %v1803
    %v1828 = vsel %vm1826, %v1825, %v1804
    %vm1829 = vcmask 1046528
    %v1830 = vsel %vm1829, %v1827, %v1807
    %v1831 = vsel %vm1829, %v1828, %v1808
    %v1832 = vld [vmem:[%s9] sm:$0x1]
    %v1833 = vld [vmem:[%s10] sm:$0x1]
    %v1834 = vld [vmem:[%s7] sm:$0xff]
    %v1835 = vld [vmem:[%s7 + $0x8] sm:$0xff]
    %v1836 = vld [vmem:[%s7 + $0x10] sm:$0xff]
    %v1837 = vld [vmem:[%s7 + $0x18] sm:$0xff]
    %v1838 = vld [vmem:[%s8] sm:$0x1]
    %v1840 = vlaneseq
    %v1841 = vshrl.u32 %v1840, 7
    %v1842 = vsub.s32 0, %v1841
    %v1843 = vrot.slane %v1838, %v1842
    %v1846 = vsel %vm78, %v1830, 0
    %v1849 = vsel %vm78, %v1831, 0
    %1851 = vmatprep.subr.mxu0 0.0
    %1852 = vmatpush1.msra.mxu0 %v1834
    %1853 = vmatprep.subr.mxu0 0.0
    %1854 = vmatpush1.msra.mxu0 %v1835
    %1855 = vmatprep.subr.mxu0 0.0
    %1856 = vmatpush1.msra.mxu0 %v1836
    %1857 = vmatprep.subr.mxu0 0.0
    %1858 = vmatpush1.msra.mxu0 %v1837
    %1859 = vmatprep.subr.mxu0 0.0
    %1860 = vmatpush1.msra.mxu0 0.0
    %1861 = vmatprep.subr.mxu0 0.0
    %1862 = vmatpush1.msra.mxu0 0.0
    %1863 = vmatprep.subr.mxu0 0.0
    %1864 = vmatpush1.msra.mxu0 0.0
    %1865 = vmatprep.subr.mxu0 0.0
    %1866 = vmatpush1.msra.mxu0 0.0
    %1867 = vmatprep.subr.mxu0 0.0
    %1868 = vmatpush1.msra.mxu0 0.0
    %1869 = vmatprep.subr.mxu0 0.0
    %1870 = vmatpush1.msra.mxu0 0.0
    %1871 = vmatprep.subr.mxu0 0.0
    %1872 = vmatpush1.msra.mxu0 0.0
    %1873 = vmatprep.subr.mxu0 0.0
    %1874 = vmatpush1.msra.mxu0 0.0
    %1875 = vmatprep.subr.mxu0 0.0
    %1876 = vmatpush1.msra.mxu0 0.0
    %1877 = vmatprep.subr.mxu0 0.0
    %1878 = vmatpush1.msra.mxu0 0.0
    %1879 = vmatprep.subr.mxu0 0.0
    %1880 = vmatpush1.msra.mxu0 0.0
    %1881 = vmatprep.subr.mxu0 0.0
    %1882 = vmatpush1.msra.mxu0 0.0
    %1883 = vmatprep.subr.mxu0 0.0
    %1884 = vmatpush1.msra.mxu0 0.0
    %1885 = vmatprep.subr.mxu0 0.0
    %1886 = vmatpush1.msra.mxu0 0.0
    %1887 = vmatprep.subr.mxu0 0.0
    %1888 = vmatpush1.msra.mxu0 0.0
    %1889 = vmatprep.subr.mxu0 0.0
    %1890 = vmatpush1.msra.mxu0 0.0
    %1891 = vmatprep.subr.mxu0 0.0
    %1892 = vmatpush1.msra.mxu0 0.0
    %1893 = vmatprep.subr.mxu0 0.0
    %1894 = vmatpush1.msra.mxu0 0.0
    %1895 = vmatprep.subr.mxu0 0.0
    %1896 = vmatpush1.msra.mxu0 0.0
    %1897 = vmatprep.subr.mxu0 0.0
    %1898 = vmatpush1.msra.mxu0 0.0
    %1899 = vmatprep.subr.mxu0 0.0
    %1900 = vmatpush1.msra.mxu0 0.0
    %1901 = vmatprep.subr.mxu0 0.0
    %1902 = vmatpush1.msra.mxu0 0.0
    %1903 = vmatprep.subr.mxu0 0.0
    %1904 = vmatpush1.msra.mxu0 0.0
    %1905 = vmatprep.subr.mxu0 0.0
    %1906 = vmatpush1.msra.mxu0 0.0
    %1907 = vmatprep.subr.mxu0 0.0
    %1908 = vmatpush1.msra.mxu0 0.0
    %1909 = vmatprep.subr.mxu0 0.0
    %1910 = vmatpush1.msra.mxu0 0.0
    %1911 = vmatprep.subr.mxu0 0.0
    %1912 = vmatpush1.msra.mxu0 0.0
    %1913 = vmatprep.subr.mxu0 0.0
    %1914 = vmatpush1.msra.mxu0 0.0
    %1915 = vmatprep.mubr.f32.mxu0 0.0
    %1916 = vmatmul.mubr.f32.gmra.mrb[0].mxu0 %v1846
    %v1917 = vpop.f32.mrb[0].mxu0
    %v1918 = vadd.f32 %v1843, %v1917
    %v1919 = vpop.f32.mrb[0].mxu0
    %1920 = vmatprep.mubr.f32.mxu0 0.0
    %1921 = vmatmul.mubr.f32.gmra.mrb[0].mxu0 %v1849
    %v1922 = vpop.f32.mrb[0].mxu0
    %v1923 = vadd.f32 %v1843, %v1922
    %v1924 = vpop.f32.mrb[0].mxu0
    %1925 = vdwg.mxu0
    %v1926 = vadd.f32 %v65, %v1918
    %v1927 = vadd.f32 %v66, %v1923
    %v1928 = vsel %vm78, %v1926, 0.0
    %1929 = vadd.xlane.f32.xlu0 %v1928
    %v1930 = vpop.xlane.xlu0 %1929
    %v1931 = vsel %vm78, %v1927, 0.0
    %1932 = vadd.xlane.f32.xlu0 %v1931
    %v1933 = vpop.xlane.xlu0 %1932
    %v1934 = vrcp.pop 32.0
    %v1935 = vmul.f32 %v1930, %v1934
    %v1936 = vmul.f32 %v1933, %v1934
    %v1937 = vsub.f32 %v1926, %v1935
    %v1938 = vsub.f32 %v1927, %v1936
    %v1939 = vmul.f32 %v1937, %v1937
    %v1940 = vmul.f32 %v1938, %v1938
    %v1941 = vsel %vm78, %v1939, 0.0
    %1942 = vadd.xlane.f32.xlu0 %v1941
    %v1943 = vpop.xlane.xlu0 %1942
    %v1944 = vsel %vm78, %v1940, 0.0
    %1945 = vadd.xlane.f32.xlu0 %v1944
    %v1946 = vpop.xlane.xlu0 %1945
    %v1947 = vmul.f32 %v1943, %v1934
    %v1948 = vmul.f32 %v1946, %v1934
    %v1949 = vadd.f32 %v1947, 1e-05
    %v1950 = vadd.f32 %v1948, 1e-05
    %v1951 = vrsqrt.pop %v1949
    %v1952 = vrsqrt.pop %v1950
    %v1953 = vmul.f32 %v1937, %v1951
    %v1954 = vmul.f32 %v1938, %v1952
    %v1956 = vlaneseq
    %v1957 = vshrl.u32 %v1956, 7
    %v1958 = vsub.s32 0, %v1957
    %v1959 = vrot.slane %v1832, %v1958
    %v1961 = vmul.f32 %v1953, %v1959
    %v1962 = vmul.f32 %v1954, %v1959
    %v1964 = vlaneseq
    %v1965 = vshrl.u32 %v1964, 7
    %v1966 = vsub.s32 0, %v1965
    %v1967 = vrot.slane %v1833, %v1966
    %v1969 = vadd.f32 %v1961, %v1967
    %v1970 = vadd.f32 %v1962, %v1967
    %v1971 = vld [vmem:[%s11] sm:$0xff]
    %v1972 = vld [vmem:[%s11 + $0x8] sm:$0xff]
    %v1973 = vld [vmem:[%s11 + $0x10] sm:$0xff]
    %v1974 = vld [vmem:[%s11 + $0x18] sm:$0xff]
    %v1975 = vld [vmem:[%s12] sm:$0x1]
    %v1977 = vlaneseq
    %v1978 = vshrl.u32 %v1977, 7
    %v1979 = vsub.s32 0, %v1978
    %v1980 = vrot.slane %v1975, %v1979
    %v1983 = vsel %vm78, %v1969, 0
    %v1986 = vsel %vm78, %v1970, 0
    %1988 = vmatprep.subr.mxu0 0.0
    %1989 = vmatpush1.msra.mxu0 %v1971
    %1990 = vmatprep.subr.mxu0 0.0
    %1991 = vmatpush1.msra.mxu0 %v1972
    %1992 = vmatprep.subr.mxu0 0.0
    %1993 = vmatpush1.msra.mxu0 %v1973
    %1994 = vmatprep.subr.mxu0 0.0
    %1995 = vmatpush1.msra.mxu0 %v1974
    %1996 = vmatprep.subr.mxu0 0.0
    %1997 = vmatpush1.msra.mxu0 0.0
    %1998 = vmatprep.subr.mxu0 0.0
    %1999 = vmatpush1.msra.mxu0 0.0
    %2000 = vmatprep.subr.mxu0 0.0
    %2001 = vmatpush1.msra.mxu0 0.0
    %2002 = vmatprep.subr.mxu0 0.0
    %2003 = vmatpush1.msra.mxu0 0.0
    %2004 = vmatprep.subr.mxu0 0.0
    %2005 = vmatpush1.msra.mxu0 0.0
    %2006 = vmatprep.subr.mxu0 0.0
    %2007 = vmatpush1.msra.mxu0 0.0
    %2008 = vmatprep.subr.mxu0 0.0
    %2009 = vmatpush1.msra.mxu0 0.0
    %2010 = vmatprep.subr.mxu0 0.0
    %2011 = vmatpush1.msra.mxu0 0.0
    %2012 = vmatprep.subr.mxu0 0.0
    %2013 = vmatpush1.msra.mxu0 0.0
    %2014 = vmatprep.subr.mxu0 0.0
    %2015 = vmatpush1.msra.mxu0 0.0
    %2016 = vmatprep.subr.mxu0 0.0
    %2017 = vmatpush1.msra.mxu0 0.0
    %2018 = vmatprep.subr.mxu0 0.0
    %2019 = vmatpush1.msra.mxu0 0.0
    %2020 = vmatprep.subr.mxu0 0.0
    %2021 = vmatpush1.msra.mxu0 0.0
    %2022 = vmatprep.subr.mxu0 0.0
    %2023 = vmatpush1.msra.mxu0 0.0
    %2024 = vmatprep.subr.mxu0 0.0
    %2025 = vmatpush1.msra.mxu0 0.0
    %2026 = vmatprep.subr.mxu0 0.0
    %2027 = vmatpush1.msra.mxu0 0.0
    %2028 = vmatprep.subr.mxu0 0.0
    %2029 = vmatpush1.msra.mxu0 0.0
    %2030 = vmatprep.subr.mxu0 0.0
    %2031 = vmatpush1.msra.mxu0 0.0
    %2032 = vmatprep.subr.mxu0 0.0
    %2033 = vmatpush1.msra.mxu0 0.0
    %2034 = vmatprep.subr.mxu0 0.0
    %2035 = vmatpush1.msra.mxu0 0.0
    %2036 = vmatprep.subr.mxu0 0.0
    %2037 = vmatpush1.msra.mxu0 0.0
    %2038 = vmatprep.subr.mxu0 0.0
    %2039 = vmatpush1.msra.mxu0 0.0
    %2040 = vmatprep.subr.mxu0 0.0
    %2041 = vmatpush1.msra.mxu0 0.0
    %2042 = vmatprep.subr.mxu0 0.0
    %2043 = vmatpush1.msra.mxu0 0.0
    %2044 = vmatprep.subr.mxu0 0.0
    %2045 = vmatpush1.msra.mxu0 0.0
    %2046 = vmatprep.subr.mxu0 0.0
    %2047 = vmatpush1.msra.mxu0 0.0
    %2048 = vmatprep.subr.mxu0 0.0
    %2049 = vmatpush1.msra.mxu0 0.0
    %2050 = vmatprep.subr.mxu0 0.0
    %2051 = vmatpush1.msra.mxu0 0.0
    %2052 = vmatprep.mubr.f32.mxu0 0.0
    %2053 = vmatmul.mubr.f32.gmra.mrb[0].mxu0 %v1983
    %v2054 = vpop.f32.mrb[0].mxu0
    %v2055 = vadd.f32 %v1980, %v2054
    %v2056 = vpop.f32.mrb[0].mxu0
    %2057 = vmatprep.mubr.f32.mxu0 0.0
    %2058 = vmatmul.mubr.f32.gmra.mrb[0].mxu0 %v1986
    %v2059 = vpop.f32.mrb[0].mxu0
    %v2060 = vadd.f32 %v1980, %v2059
    %v2061 = vpop.f32.mrb[0].mxu0
    %2062 = vdwg.mxu0
    %v2063 = vmax.f32 %v2055, 0.0
    %v2064 = vmax.f32 %v2060, 0.0
    %v2065 = vld [vmem:[%s13] sm:$0xff]
    %v2066 = vld [vmem:[%s13 + $0x8] sm:$0xff]
    %v2067 = vld [vmem:[%s13 + $0x10] sm:$0xff]
    %v2068 = vld [vmem:[%s13 + $0x18] sm:$0xff]
    %v2069 = vld [vmem:[%s13 + $0x20] sm:$0xff]
    %v2070 = vld [vmem:[%s13 + $0x28] sm:$0xff]
    %v2071 = vld [vmem:[%s13 + $0x30] sm:$0xff]
    %v2072 = vld [vmem:[%s13 + $0x38] sm:$0xff]
    %v2073 = vld [vmem:[%s13 + $0x40] sm:$0xff]
    %v2074 = vld [vmem:[%s13 + $0x48] sm:$0xff]
    %v2075 = vld [vmem:[%s13 + $0x50] sm:$0xff]
    %v2076 = vld [vmem:[%s13 + $0x58] sm:$0xff]
    %v2077 = vld [vmem:[%s13 + $0x60] sm:$0xff]
    %v2078 = vld [vmem:[%s13 + $0x68] sm:$0xff]
    %v2079 = vld [vmem:[%s13 + $0x70] sm:$0xff]
    %v2080 = vld [vmem:[%s13 + $0x78] sm:$0xff]
    %v2081 = vld [vmem:[%s14] sm:$0x1]
    %v2083 = vlaneseq
    %v2084 = vshrl.u32 %v2083, 7
    %v2085 = vsub.s32 0, %v2084
    %v2086 = vrot.slane %v2081, %v2085
    %2088 = vmatprep.subr.mxu0 0.0
    %2089 = vmatpush1.msra.mxu0 %v2065
    %2090 = vmatprep.subr.mxu0 0.0
    %2091 = vmatpush1.msra.mxu0 %v2066
    %2092 = vmatprep.subr.mxu0 0.0
    %2093 = vmatpush1.msra.mxu0 %v2067
    %2094 = vmatprep.subr.mxu0 0.0
    %2095 = vmatpush1.msra.mxu0 %v2068
    %2096 = vmatprep.subr.mxu0 0.0
    %2097 = vmatpush1.msra.mxu0 %v2069
    %2098 = vmatprep.subr.mxu0 0.0
    %2099 = vmatpush1.msra.mxu0 %v2070
    %2100 = vmatprep.subr.mxu0 0.0
    %2101 = vmatpush1.msra.mxu0 %v2071
    %2102 = vmatprep.subr.mxu0 0.0
    %2103 = vmatpush1.msra.mxu0 %v2072
    %2104 = vmatprep.subr.mxu0 0.0
    %2105 = vmatpush1.msra.mxu0 %v2073
    %2106 = vmatprep.subr.mxu0 0.0
    %2107 = vmatpush1.msra.mxu0 %v2074
    %2108 = vmatprep.subr.mxu0 0.0
    %2109 = vmatpush1.msra.mxu0 %v2075
    %2110 = vmatprep.subr.mxu0 0.0
    %2111 = vmatpush1.msra.mxu0 %v2076
    %2112 = vmatprep.subr.mxu0 0.0
    %2113 = vmatpush1.msra.mxu0 %v2077
    %2114 = vmatprep.subr.mxu0 0.0
    %2115 = vmatpush1.msra.mxu0 %v2078
    %2116 = vmatprep.subr.mxu0 0.0
    %2117 = vmatpush1.msra.mxu0 %v2079
    %2118 = vmatprep.subr.mxu0 0.0
    %2119 = vmatpush1.msra.mxu0 %v2080
    %2120 = vmatprep.subr.mxu0 0.0
    %2121 = vmatpush1.msra.mxu0 0.0
    %2122 = vmatprep.subr.mxu0 0.0
    %2123 = vmatpush1.msra.mxu0 0.0
    %2124 = vmatprep.subr.mxu0 0.0
    %2125 = vmatpush1.msra.mxu0 0.0
    %2126 = vmatprep.subr.mxu0 0.0
    %2127 = vmatpush1.msra.mxu0 0.0
    %2128 = vmatprep.subr.mxu0 0.0
    %2129 = vmatpush1.msra.mxu0 0.0
    %2130 = vmatprep.subr.mxu0 0.0
    %2131 = vmatpush1.msra.mxu0 0.0
    %2132 = vmatprep.subr.mxu0 0.0
    %2133 = vmatpush1.msra.mxu0 0.0
    %2134 = vmatprep.subr.mxu0 0.0
    %2135 = vmatpush1.msra.mxu0 0.0
    %2136 = vmatprep.subr.mxu0 0.0
    %2137 = vmatpush1.msra.mxu0 0.0
    %2138 = vmatprep.subr.mxu0 0.0
    %2139 = vmatpush1.msra.mxu0 0.0
    %2140 = vmatprep.subr.mxu0 0.0
    %2141 = vmatpush1.msra.mxu0 0.0
    %2142 = vmatprep.subr.mxu0 0.0
    %2143 = vmatpush1.msra.mxu0 0.0
    %2144 = vmatprep.subr.mxu0 0.0
    %2145 = vmatpush1.msra.mxu0 0.0
    %2146 = vmatprep.subr.mxu0 0.0
    %2147 = vmatpush1.msra.mxu0 0.0
    %2148 = vmatprep.subr.mxu0 0.0
    %2149 = vmatpush1.msra.mxu0 0.0
    %2150 = vmatprep.subr.mxu0 0.0
    %2151 = vmatpush1.msra.mxu0 0.0
    %2152 = vmatprep.mubr.f32.mxu0 0.0
    %2153 = vmatmul.mubr.f32.gmra.mrb[0].mxu0 %v2063
    %v2154 = vpop.f32.mrb[0].mxu0
    %v2155 = vadd.f32 %v2086, %v2154
    %v2156 = vpop.f32.mrb[0].mxu0
    %2157 = vmatprep.mubr.f32.mxu0 0.0
    %2158 = vmatmul.mubr.f32.gmra.mrb[0].mxu0 %v2064
    %v2159 = vpop.f32.mrb[0].mxu0
    %v2160 = vadd.f32 %v2086, %v2159
    %v2161 = vpop.f32.mrb[0].mxu0
    %2162 = vdwg.mxu0
    %v2163 = vadd.f32 %v1969, %v2155
    %v2164 = vadd.f32 %v1970, %v2160
    %v2165 = vsel %vm78, %v2163, 0.0
    %2166 = vadd.xlane.f32.xlu0 %v2165
    %v2167 = vpop.xlane.xlu0 %2166
    %v2168 = vsel %vm78, %v2164, 0.0
    %2169 = vadd.xlane.f32.xlu0 %v2168
    %v2170 = vpop.xlane.xlu0 %2169
    %v2171 = vmul.f32 %v2167, %v1934
    %v2172 = vmul.f32 %v2170, %v1934
    %v2173 = vsub.f32 %v2163, %v2171
    %v2174 = vsub.f32 %v2164, %v2172
    %v2175 = vmul.f32 %v2173, %v2173
    %v2176 = vmul.f32 %v2174, %v2174
    %v2177 = vsel %vm78, %v2175, 0.0
    %2178 = vadd.xlane.f32.xlu0 %v2177
    %v2179 = vpop.xlane.xlu0 %2178
    %v2180 = vsel %vm78, %v2176, 0.0
    %2181 = vadd.xlane.f32.xlu0 %v2180
    %v2182 = vpop.xlane.xlu0 %2181
    %v2183 = vmul.f32 %v2179, %v1934
    %v2184 = vmul.f32 %v2182, %v1934
    %v2185 = vadd.f32 %v2183, 1e-05
    %v2186 = vadd.f32 %v2184, 1e-05
    %v2187 = vrsqrt.pop %v2185
    %v2188 = vrsqrt.pop %v2186
    %v2189 = vmul.f32 %v2173, %v2187
    %v2190 = vmul.f32 %v2174, %v2188
    %v2191 = vmul.f32 %v2189, %v1959
    %v2192 = vmul.f32 %v2190, %v1959
    %v2193 = vadd.f32 %v2191, %v1967
    %v2194 = vadd.f32 %v2192, %v1967
    %2195 = vst.msk [vmem:[#allocation5] sm:$0xff] %vm78, %v2193
    %2196 = vst.msk [vmem:[#allocation5 + $0x8] sm:$0xff] %vm78, %v2194
    // Predicated region
    $region66: #{tpu_custom_call.1} parent=1 // pred_check
      _
    $region67: #{tpu_custom_call.1} parent=1 // pred_check_branch
      %2198 = sbr.rel (0) target = $region69
    $region68: #{tpu_custom_call.1} parent=1 // pred_region
      %s2200 = ssub.s32 256, 256
      %2201 = vsyncadd [#allocation4], %s2200
      %s2202 = sshll.u32 [#allocation5], 4
      %s2203 = int_to_ptr.vmem [resolvable:$true] %s2202
      %2208 = dma.vmem_to_hbm [thread:$0]  %s2203, 256, %s15, [#allocation4], 128, 128, 8
    $region69: #{tpu_custom_call.1} parent=1 // pred_fallthru
      _
    // Predicated region
    $region70: #{tpu_custom_call.1} parent=1 // pred_check
      _
    $region71: #{tpu_custom_call.1} parent=1 // pred_check_branch
      %2210 = sbr.rel (0) target = $region73
    $region72: #{tpu_custom_call.1} parent=1 // pred_region
      %2211 = dma.done [#allocation4], 256
    $region73: #{tpu_custom_call.1} parent=1 // pred_fallthru
      _
    %2212 = vsyncpa [#allocation3], 1
    %2213 = vsyncpa [#allocation4], 1

</llo_original>
